<compile_context>
chip_gen: v7x
topology: tpu7x:2x2x1
jax: 0.10.0
libtpu: 0.0.40
codegen_flags: <defaults>
</compile_context>

<pallas_src>
import functools

import jax
import jax.numpy as jnp
from jax.experimental import pallas as pl
from jax.experimental.pallas import tpu as pltpu


# ----------------------------- Pallas kernel -------------------------------

def _fused_gcn_kernel(*refs, layer_cfg, K):
    """Fused 4-layer GCN.

    refs layout:
      refs[0]            : x      (R, C_in)            R = NM * V
      per layer (in order):
          A_bd           : (K, R, R)   block-diag of (A*importance)^T
          wg             : (C_in, K*C_out)
          bg             : (1, K*C_out)
          [wr, br]       : (C_in, C_out), (1, C_out)   only if mode == "proj"
      refs[-1]           : out    (R, C_out_last)
    """
    x_ref = refs[0]
    o_ref = refs[-1]

    h = x_ref[...]                                             # (R, C_in) f32
    idx = 1
    for (c_out, mode) in layer_cfg:
        a_ref = refs[idx]                                      # (K, R, R)
        wg_ref = refs[idx + 1]                                 # (C_in, K*C_out)
        bg_ref = refs[idx + 2]                                 # (1, K*C_out)
        idx += 3
        if mode == "proj":
            wr_ref = refs[idx]                                 # (C_in, C_out)
            br_ref = refs[idx + 1]                             # (1, C_out)
            idx += 2

        # 1x1 "conv" (feature matmul) for all NM*V rows at once.
        z = jnp.dot(h, wg_ref[...], preferred_element_type=jnp.float32)
        z = z + bg_ref[...]                                    # (R, K*C_out)

        # Graph aggregation: block-diag A^T is pre-built, no in-kernel .T.
        acc = jnp.dot(a_ref[0], z[:, :c_out],
                      preferred_element_type=jnp.float32)      # (R, C_out)
        for k in range(1, K):                                  # K is tiny & static
            acc = acc + jnp.dot(a_ref[k], z[:, k * c_out:(k + 1) * c_out],
                                preferred_element_type=jnp.float32)

        # Residual.
        if mode == "identity":
            acc = acc + h
        elif mode == "proj":
            acc = acc + jnp.dot(h, wr_ref[...],
                                preferred_element_type=jnp.float32) + br_ref[...]

        h = jnp.maximum(acc, 0.0)                              # ReLU, stays in VMEM

    o_ref[...] = h.astype(o_ref.dtype)


# ------------------------------ Model wrapper -------------------------------

def build_graph_adjacency():
    """COCO-17 ('mmpose') skeleton, 'uniform' strategy -> A of shape (1, 17, 17)."""
    V = 17
    edges = [(15, 13), (13, 11), (16, 14), (14, 12), (11, 12), (5, 11), (6, 12),
             (5, 6), (5, 7), (6, 8), (7, 9), (8, 10), (1, 2), (0, 1), (0, 2),
             (1, 3), (2, 4), (3, 5), (4, 6)]
    adj = jnp.eye(V, dtype=jnp.float32)
    for i, j in edges:
        adj = adj.at[i, j].set(1.0)
        adj = adj.at[j, i].set(1.0)
    # normalize_digraph: A @ D^-1
    deg = jnp.sum(adj, axis=0)
    dn = jnp.where(deg > 0, 1.0 / deg, 0.0)
    a_norm = adj * dn[None, :]
    return a_norm[None]  # (K=1, V, V)


def init_params(key, in_channels, A):
    K = A.shape[0]
    cfgs = [(in_channels, 64, "none"),   # residual=False
            (64, 64, "identity"),        # in==out, stride 1
            (64, 128, "proj"),           # conv1x1 + BN residual
            (128, 256, "proj")]
    eps = 1e-5
    bn_scale = 1.0 / jnp.sqrt(1.0 + eps)  # fresh BatchNorm2d, eval mode (mean=0, var=1, g=1, b=0)
    params = []
    for (ci, co, mode) in cfgs:
        key, k1, k2, k3, k4 = jax.random.split(key, 5)
        bound = 1.0 / jnp.sqrt(float(ci))  # kaiming-uniform-like bound for a 1x1 conv
        wg = jax.random.uniform(k1, (ci, K * co), jnp.float32, -bound, bound)
        bg = jax.random.uniform(k2, (K * co,), jnp.float32, -bound, bound)
        if mode == "proj":
            wr = jax.random.uniform(k3, (ci, co), jnp.float32, -bound, bound) * bn_scale
            br = jax.random.uniform(k4, (co,), jnp.float32, -bound, bound) * bn_scale
        else:
            wr, br = None, None
        importance = jnp.ones(A.shape, jnp.float32)  # edge_importance_weighting=True (init=1)
        params.append(dict(wg=wg, bg=bg, wr=wr, br=br, mode=mode, importance=importance))
    return params


def gcn_model_forward(x_ncvm, A, params):
    """x_ncvm: (N, C, V, M) exactly like the PyTorch module's forward input."""
    N, C, V, M = x_ncvm.shape
    NM = N * M
    R = NM * V
    K = A.shape[0]

    # PyTorch's reshape/permute chain reduces to: x[nm, c, 0, v] = x[n, c, v, m].
    # Channels-last, then flatten (nm, v) into one row axis: row = nm*V + v.
    x = jnp.transpose(x_ncvm, (0, 3, 2, 1)).reshape(R, C)      # (NM*V, C_in)

    eye_nm = jnp.eye(NM, dtype=jnp.float32)
    inputs = [x]
    layer_cfg = []
    for p in params:
        A_eff_T = jnp.transpose(A * p["importance"], (0, 2, 1))          # (K, V, V)
        # Block-diagonal over samples so the whole batch is one aggregation matmul.
        A_bd = jnp.stack([jnp.kron(eye_nm, A_eff_T[k]) for k in range(K)])  # (K, R, R)
        c_out = p["wg"].shape[1] // K
        inputs += [A_bd, p["wg"], p["bg"].reshape(1, -1)]
        if p["mode"] == "proj":
            inputs += [p["wr"], p["br"].reshape(1, -1)]
        layer_cfg.append((c_out, p["mode"]))

    c_final = layer_cfg[-1][0]
    kernel = functools.partial(_fused_gcn_kernel, layer_cfg=tuple(layer_cfg), K=K)

    # Single invocation (no grid): everything lives in VMEM for the whole net;
    # only the final lane-dense (R, 256) slab is written back to HBM.
    vmem_spec = pl.BlockSpec(memory_space=pltpu.MemorySpace.VMEM)
    out_flat = pl.pallas_call(
        kernel,
        out_shape=jax.ShapeDtypeStruct((R, c_final), jnp.float32),
        in_specs=[vmem_spec] * len(inputs),
        out_specs=vmem_spec,
    )(*inputs)

    # Back to the PyTorch output layout (N*M, C_out, T=1, V).
    out = out_flat.reshape(NM, V, c_final)
    return jnp.transpose(out, (0, 2, 1))[:, :, None, :]


# --------------------------- Pure-JAX reference -----------------------------

def _ref_layer(x, A, p):
    K = A.shape[0]
    c_out = p["wg"].shape[1] // K
    NM, V, _ = x.shape
    h = x @ p["wg"] + p["bg"]                       # (NM, V, K*C_out)
    h = h.reshape(NM, V, K, c_out)
    y = jnp.einsum("nvkc,kvw->nwc", h, A)
    if p["mode"] == "identity":
        y = y + x
    elif p["mode"] == "proj":
        y = y + x @ p["wr"] + p["br"]
    return jnp.maximum(y, 0.0)


def ref_forward(x_ncvm, A, params):
    N, C, V, M = x_ncvm.shape
    x = jnp.transpose(x_ncvm, (0, 3, 2, 1)).reshape(N * M, V, C)
    for p in params:
        x = _ref_layer(x, A * p["importance"], p)
    return jnp.transpose(x, (0, 2, 1))[:, :, None, :]


# ----------------------------------- main ------------------------------------

if __name__ == "__main__":
    key = jax.random.PRNGKey(0)
    k_x, k_p = jax.random.split(key)

    N, C_in, V, M = 2, 3, 17, 1          # forward reads (N, C, V, M); mmpose -> V=17 nodes
    x = jax.random.normal(k_x, (N, C_in, V, M), jnp.float32)

    A = build_graph_adjacency()          # (K=1, 17, 17)
    params = init_params(k_p, C_in, A)

    out = gcn_model_forward(x, A, params)
    out = jax.block_until_ready(out)

    assert out.shape == (N * M, 256, 1, V), out.shape

    ref = ref_forward(x, A, params)
    if not jnp.allclose(out, ref, atol=1e-4, rtol=1e-4):
        raise AssertionError("Pallas output does not match JAX reference")

    print("KERNEL_OK")
</pallas_src>

<mosaic_0001>
module attributes {stable_mosaic.version = 11 : i64} {
  func.func @_fused_gcn_kernel(%arg0: memref<34x3xf32, #tpu.memory_space<vmem>>, %arg1: memref<1x34x34xf32, #tpu.memory_space<vmem>>, %arg2: memref<3x64xf32, #tpu.memory_space<vmem>>, %arg3: memref<1x64xf32, #tpu.memory_space<vmem>>, %arg4: memref<1x34x34xf32, #tpu.memory_space<vmem>>, %arg5: memref<64x64xf32, #tpu.memory_space<vmem>>, %arg6: memref<1x64xf32, #tpu.memory_space<vmem>>, %arg7: memref<1x34x34xf32, #tpu.memory_space<vmem>>, %arg8: memref<64x128xf32, #tpu.memory_space<vmem>>, %arg9: memref<1x128xf32, #tpu.memory_space<vmem>>, %arg10: memref<64x128xf32, #tpu.memory_space<vmem>>, %arg11: memref<1x128xf32, #tpu.memory_space<vmem>>, %arg12: memref<1x34x34xf32, #tpu.memory_space<vmem>>, %arg13: memref<128x256xf32, #tpu.memory_space<vmem>>, %arg14: memref<1x256xf32, #tpu.memory_space<vmem>>, %arg15: memref<128x256xf32, #tpu.memory_space<vmem>>, %arg16: memref<1x256xf32, #tpu.memory_space<vmem>>, %arg17: memref<34x256xf32, #tpu.memory_space<vmem>>) attributes {dimension_semantics = [], scalar_prefetch = 0 : i64, scratch_operands = 0 : i64, tpu.core_type = #tpu.core_type<tc>} {
    %c0 = arith.constant 0 : index
    %c0_0 = arith.constant 0 : index
    %0 = vector.load %arg0[%c0, %c0_0] : memref<34x3xf32, #tpu.memory_space<vmem>>, vector<34x3xf32>
    %c0_1 = arith.constant 0 : index
    %c0_2 = arith.constant 0 : index
    %1 = vector.load %arg2[%c0_1, %c0_2] : memref<3x64xf32, #tpu.memory_space<vmem>>, vector<3x64xf32>
    %cst = arith.constant dense<0.000000e+00> : vector<34x64xf32>
    %2 = tpu.matmul %0, %1, %cst {dimension_numbers = #tpu.dot_dimension_numbers<[1], [0], [0], [1], [0, 0, 1, 1], [], []>} : vector<34x3xf32>, vector<3x64xf32>, vector<34x64xf32> -> vector<34x64xf32>
    %c0_3 = arith.constant 0 : index
    %c0_4 = arith.constant 0 : index
    %3 = vector.load %arg3[%c0_3, %c0_4] : memref<1x64xf32, #tpu.memory_space<vmem>>, vector<1x64xf32>
    %4 = vector.broadcast %3 : vector<1x64xf32> to vector<34x64xf32>
    %5 = arith.addf %2, %4 : vector<34x64xf32>
    %c0_5 = arith.constant 0 : index
    %c0_6 = arith.constant 0 : index
    %c0_7 = arith.constant 0 : index
    %6 = vector.load %arg1[%c0_5, %c0_6, %c0_7] : memref<1x34x34xf32, #tpu.memory_space<vmem>>, vector<1x34x34xf32>
    %7 = vector.shape_cast %6 : vector<1x34x34xf32> to vector<34x34xf32>
    %cst_8 = arith.constant dense<0.000000e+00> : vector<34x64xf32>
    %8 = tpu.matmul %7, %5, %cst_8 {dimension_numbers = #tpu.dot_dimension_numbers<[1], [0], [0], [1], [0, 0, 1, 1], [], []>} : vector<34x34xf32>, vector<34x64xf32>, vector<34x64xf32> -> vector<34x64xf32>
    %cst_9 = arith.constant 0.000000e+00 : f32
    %9 = vector.broadcast %cst_9 : f32 to vector<34x64xf32>
    %10 = arith.maximumf %8, %9 : vector<34x64xf32>
    %c0_10 = arith.constant 0 : index
    %c0_11 = arith.constant 0 : index
    %11 = vector.load %arg5[%c0_10, %c0_11] : memref<64x64xf32, #tpu.memory_space<vmem>>, vector<64x64xf32>
    %cst_12 = arith.constant dense<0.000000e+00> : vector<34x64xf32>
    %12 = tpu.matmul %10, %11, %cst_12 {dimension_numbers = #tpu.dot_dimension_numbers<[1], [0], [0], [1], [0, 0, 1, 1], [], []>} : vector<34x64xf32>, vector<64x64xf32>, vector<34x64xf32> -> vector<34x64xf32>
    %c0_13 = arith.constant 0 : index
    %c0_14 = arith.constant 0 : index
    %13 = vector.load %arg6[%c0_13, %c0_14] : memref<1x64xf32, #tpu.memory_space<vmem>>, vector<1x64xf32>
    %14 = vector.broadcast %13 : vector<1x64xf32> to vector<34x64xf32>
    %15 = arith.addf %12, %14 : vector<34x64xf32>
    %c0_15 = arith.constant 0 : index
    %c0_16 = arith.constant 0 : index
    %c0_17 = arith.constant 0 : index
    %16 = vector.load %arg4[%c0_15, %c0_16, %c0_17] : memref<1x34x34xf32, #tpu.memory_space<vmem>>, vector<1x34x34xf32>
    %17 = vector.shape_cast %16 : vector<1x34x34xf32> to vector<34x34xf32>
    %cst_18 = arith.constant dense<0.000000e+00> : vector<34x64xf32>
    %18 = tpu.matmul %17, %15, %cst_18 {dimension_numbers = #tpu.dot_dimension_numbers<[1], [0], [0], [1], [0, 0, 1, 1], [], []>} : vector<34x34xf32>, vector<34x64xf32>, vector<34x64xf32> -> vector<34x64xf32>
    %19 = arith.addf %18, %10 : vector<34x64xf32>
    %cst_19 = arith.constant 0.000000e+00 : f32
    %20 = vector.broadcast %cst_19 : f32 to vector<34x64xf32>
    %21 = arith.maximumf %19, %20 : vector<34x64xf32>
    %c0_20 = arith.constant 0 : index
    %c0_21 = arith.constant 0 : index
    %22 = vector.load %arg8[%c0_20, %c0_21] : memref<64x128xf32, #tpu.memory_space<vmem>>, vector<64x128xf32>
    %cst_22 = arith.constant dense<0.000000e+00> : vector<34x128xf32>
    %23 = tpu.matmul %21, %22, %cst_22 {dimension_numbers = #tpu.dot_dimension_numbers<[1], [0], [0], [1], [0, 0, 1, 1], [], []>} : vector<34x64xf32>, vector<64x128xf32>, vector<34x128xf32> -> vector<34x128xf32>
    %c0_23 = arith.constant 0 : index
    %c0_24 = arith.constant 0 : index
    %24 = vector.load %arg9[%c0_23, %c0_24] : memref<1x128xf32, #tpu.memory_space<vmem>>, vector<1x128xf32>
    %25 = vector.broadcast %24 : vector<1x128xf32> to vector<34x128xf32>
    %26 = arith.addf %23, %25 : vector<34x128xf32>
    %c0_25 = arith.constant 0 : index
    %c0_26 = arith.constant 0 : index
    %c0_27 = arith.constant 0 : index
    %27 = vector.load %arg7[%c0_25, %c0_26, %c0_27] : memref<1x34x34xf32, #tpu.memory_space<vmem>>, vector<1x34x34xf32>
    %28 = vector.shape_cast %27 : vector<1x34x34xf32> to vector<34x34xf32>
    %cst_28 = arith.constant dense<0.000000e+00> : vector<34x128xf32>
    %29 = tpu.matmul %28, %26, %cst_28 {dimension_numbers = #tpu.dot_dimension_numbers<[1], [0], [0], [1], [0, 0, 1, 1], [], []>} : vector<34x34xf32>, vector<34x128xf32>, vector<34x128xf32> -> vector<34x128xf32>
    %c0_29 = arith.constant 0 : index
    %c0_30 = arith.constant 0 : index
    %30 = vector.load %arg10[%c0_29, %c0_30] : memref<64x128xf32, #tpu.memory_space<vmem>>, vector<64x128xf32>
    %cst_31 = arith.constant dense<0.000000e+00> : vector<34x128xf32>
    %31 = tpu.matmul %21, %30, %cst_31 {dimension_numbers = #tpu.dot_dimension_numbers<[1], [0], [0], [1], [0, 0, 1, 1], [], []>} : vector<34x64xf32>, vector<64x128xf32>, vector<34x128xf32> -> vector<34x128xf32>
    %32 = arith.addf %29, %31 : vector<34x128xf32>
    %c0_32 = arith.constant 0 : index
    %c0_33 = arith.constant 0 : index
    %33 = vector.load %arg11[%c0_32, %c0_33] : memref<1x128xf32, #tpu.memory_space<vmem>>, vector<1x128xf32>
    %34 = vector.broadcast %33 : vector<1x128xf32> to vector<34x128xf32>
    %35 = arith.addf %32, %34 : vector<34x128xf32>
    %cst_34 = arith.constant 0.000000e+00 : f32
    %36 = vector.broadcast %cst_34 : f32 to vector<34x128xf32>
    %37 = arith.maximumf %35, %36 : vector<34x128xf32>
    %c0_35 = arith.constant 0 : index
    %c0_36 = arith.constant 0 : index
    %38 = vector.load %arg13[%c0_35, %c0_36] : memref<128x256xf32, #tpu.memory_space<vmem>>, vector<128x256xf32>
    %cst_37 = arith.constant dense<0.000000e+00> : vector<34x256xf32>
    %39 = tpu.matmul %37, %38, %cst_37 {dimension_numbers = #tpu.dot_dimension_numbers<[1], [0], [0], [1], [0, 0, 1, 1], [], []>} : vector<34x128xf32>, vector<128x256xf32>, vector<34x256xf32> -> vector<34x256xf32>
    %c0_38 = arith.constant 0 : index
    %c0_39 = arith.constant 0 : index
    %40 = vector.load %arg14[%c0_38, %c0_39] : memref<1x256xf32, #tpu.memory_space<vmem>>, vector<1x256xf32>
    %41 = vector.broadcast %40 : vector<1x256xf32> to vector<34x256xf32>
    %42 = arith.addf %39, %41 : vector<34x256xf32>
    %c0_40 = arith.constant 0 : index
    %c0_41 = arith.constant 0 : index
    %c0_42 = arith.constant 0 : index
    %43 = vector.load %arg12[%c0_40, %c0_41, %c0_42] : memref<1x34x34xf32, #tpu.memory_space<vmem>>, vector<1x34x34xf32>
    %44 = vector.shape_cast %43 : vector<1x34x34xf32> to vector<34x34xf32>
    %cst_43 = arith.constant dense<0.000000e+00> : vector<34x256xf32>
    %45 = tpu.matmul %44, %42, %cst_43 {dimension_numbers = #tpu.dot_dimension_numbers<[1], [0], [0], [1], [0, 0, 1, 1], [], []>} : vector<34x34xf32>, vector<34x256xf32>, vector<34x256xf32> -> vector<34x256xf32>
    %c0_44 = arith.constant 0 : index
    %c0_45 = arith.constant 0 : index
    %46 = vector.load %arg15[%c0_44, %c0_45] : memref<128x256xf32, #tpu.memory_space<vmem>>, vector<128x256xf32>
    %cst_46 = arith.constant dense<0.000000e+00> : vector<34x256xf32>
    %47 = tpu.matmul %37, %46, %cst_46 {dimension_numbers = #tpu.dot_dimension_numbers<[1], [0], [0], [1], [0, 0, 1, 1], [], []>} : vector<34x128xf32>, vector<128x256xf32>, vector<34x256xf32> -> vector<34x256xf32>
    %48 = arith.addf %45, %47 : vector<34x256xf32>
    %c0_47 = arith.constant 0 : index
    %c0_48 = arith.constant 0 : index
    %49 = vector.load %arg16[%c0_47, %c0_48] : memref<1x256xf32, #tpu.memory_space<vmem>>, vector<1x256xf32>
    %50 = vector.broadcast %49 : vector<1x256xf32> to vector<34x256xf32>
    %51 = arith.addf %48, %50 : vector<34x256xf32>
    %cst_49 = arith.constant 0.000000e+00 : f32
    %52 = vector.broadcast %cst_49 : f32 to vector<34x256xf32>
    %53 = arith.maximumf %51, %52 : vector<34x256xf32>
    %c0_50 = arith.constant 0 : index
    %c0_51 = arith.constant 0 : index
    %54 = vector.load %arg17[%c0_50, %c0_51] : memref<34x256xf32, #tpu.memory_space<vmem>>, vector<34x256xf32>
    tpu.vector_store %arg17[%c0_50, %c0_51], %53 {strides = array<i32>} : memref<34x256xf32, #tpu.memory_space<vmem>>, vector<34x256xf32>,
    return
  }
}

</mosaic_0001>

<llo_original>
// kernel: tpu_custom_call.1
$region0: #{tpu_custom_call.1}
  #allocation0 [shape = 'u32[]', space=smem, size = 0x4, offset = 0x4, fixed_abs, tag = 'smem constant byte address 0x4 - core index']
  #allocation1 [shape = 'u32[144,128]{1,0:T(1,128)}', space=vmem, size = 0x12000, scoped, tag = 'internal scratch']
  %s0 = inlined_call_operand.vmem [shape: f32[34,3], index: 0, kind: input, shape index: {}]
  %s1 = inlined_call_operand.vmem [shape: f32[1,34,34], index: 1, kind: input, shape index: {}]
  %s2 = inlined_call_operand.vmem [shape: f32[3,64], index: 2, kind: input, shape index: {}]
  %s3 = inlined_call_operand.hbm [shape: f32[1,64], index: 3, kind: input, shape index: {}]
  %s4 = inlined_call_operand.vmem [shape: f32[1,34,34], index: 4, kind: input, shape index: {}]
  %s5 = inlined_call_operand.vmem [shape: f32[64,64], index: 5, kind: input, shape index: {}]
  %s6 = inlined_call_operand.hbm [shape: f32[1,64], index: 6, kind: input, shape index: {}]
  %s7 = inlined_call_operand.vmem [shape: f32[1,34,34], index: 7, kind: input, shape index: {}]
  %s8 = inlined_call_operand.vmem [shape: f32[64,128], index: 8, kind: input, shape index: {}]
  %s9 = inlined_call_operand.hbm [shape: f32[1,128], index: 9, kind: input, shape index: {}]
  %s10 = inlined_call_operand.hbm [shape: f32[64,128], index: 10, kind: input, shape index: {}]
  %s11 = inlined_call_operand.hbm [shape: f32[1,128], index: 11, kind: input, shape index: {}]
  %s12 = inlined_call_operand.vmem [shape: f32[1,34,34], index: 12, kind: input, shape index: {}]
  %s13 = inlined_call_operand.vmem [shape: f32[128,256], index: 13, kind: input, shape index: {}]
  %s14 = inlined_call_operand.vmem [shape: f32[1,256], index: 14, kind: input, shape index: {}]
  %s15 = inlined_call_operand.hbm [shape: f32[128,256], index: 15, kind: input, shape index: {}]
  %s16 = inlined_call_operand.vmem [shape: f32[1,256], index: 16, kind: input, shape index: {}]
  %s17 = inlined_call_operand.hbm [shape: f32[34,256], index: 17, kind: output, shape index: {}]
  %s18 = sld [smem:[#allocation0]]
  $region102: #{tpu_custom_call.1} parent=0
    _
  %s20 = ssub.s32 1, %s18
  %s21 = scalar_select 0, %s20, %s18
  $region1: #{tpu_custom_call.1} parent=0
    #allocation2 [shape = 'u8[512]{0}', space=vmem, size = 0x400, scoped, tag = 'input window, operand 3, single buffered']
    #allocation3 [shape = 's32[1]{0}', space=sflag, size = 0x4, scoped, tag = 'scoped memory for tpu_custom_call.1']
    #allocation4 [shape = 's32[1]{0}', space=sflag, size = 0x4, scoped, tag = 'scoped memory for tpu_custom_call.1']
    #allocation5 [shape = 'u8[512]{0}', space=vmem, size = 0x400, scoped, tag = 'input window, operand 6, single buffered']
    #allocation6 [shape = 's32[1]{0}', space=sflag, size = 0x4, scoped, tag = 'scoped memory for tpu_custom_call.1']
    #allocation7 [shape = 'u8[512]{0}', space=vmem, size = 0x400, scoped, tag = 'input window, operand 9, single buffered']
    #allocation8 [shape = 'u8[32768]{0}', space=vmem, size = 0x8000, scoped, tag = 'input window, operand 10, single buffered']
    #allocation9 [shape = 's32[1]{0}', space=sflag, size = 0x4, scoped, tag = 'scoped memory for tpu_custom_call.1']
    #allocation10 [shape = 'u8[512]{0}', space=vmem, size = 0x400, scoped, tag = 'input window, operand 11, single buffered']
    #allocation11 [shape = 'u8[131072]{0}', space=vmem, size = 0x20000, scoped, tag = 'input window, operand 15, single buffered']
    #allocation12 [shape = 's32[1]{0}', space=sflag, size = 0x4, scoped, tag = 'scoped memory for tpu_custom_call.1']
    #allocation13 [shape = 'u8[40960]{0}', space=vmem, size = 0xa000, scoped, tag = 'output window, operand 0, single buffered']
    %22 = vsyncpa [#allocation3], 0
    %23 = vsyncpa [#allocation6], 0
    %24 = vsyncpa [#allocation9], 0
    %25 = vsyncpa [#allocation12], 0
    %26 = vsyncpa [#allocation4], 0
    // Predicated region
    $region2: #{tpu_custom_call.1} parent=1 // pred_check
      _
    $region3: #{tpu_custom_call.1} parent=1 // pred_check_branch
      %28 = sbr.rel (0) target = $region5
    $region4: #{tpu_custom_call.1} parent=1 // pred_region
      _
    $region5: #{tpu_custom_call.1} parent=1 // pred_fallthru
      _
    // Predicated region
    $region6: #{tpu_custom_call.1} parent=1 // pred_check
      _
    $region7: #{tpu_custom_call.1} parent=1 // pred_check_branch
      %30 = sbr.rel (0) target = $region9
    $region8: #{tpu_custom_call.1} parent=1 // pred_region
      _
    $region9: #{tpu_custom_call.1} parent=1 // pred_fallthru
      _
    // Predicated region
    $region10: #{tpu_custom_call.1} parent=1 // pred_check
      _
    $region11: #{tpu_custom_call.1} parent=1 // pred_check_branch
      %32 = sbr.rel (0) target = $region13
    $region12: #{tpu_custom_call.1} parent=1 // pred_region
      _
    $region13: #{tpu_custom_call.1} parent=1 // pred_fallthru
      _
    // Predicated region
    $region14: #{tpu_custom_call.1} parent=1 // pred_check
      _
    $region15: #{tpu_custom_call.1} parent=1 // pred_check_branch
      %34 = sbr.rel (0) target = $region17
    $region16: #{tpu_custom_call.1} parent=1 // pred_region
      %s36 = ssub.s32 16, 16
      %37 = vsyncadd [#allocation3], %s36
      %s39 = sshll.u32 [#allocation2], 4
      %s40 = int_to_ptr.vmem [resolvable:$true] %s39
      %42 = dma.hbm_to_vmem [thread:$0]  %s3, 16, %s40, [#allocation3]
    $region17: #{tpu_custom_call.1} parent=1 // pred_fallthru
      _
    // Predicated region
    $region18: #{tpu_custom_call.1} parent=1 // pred_check
      _
    $region19: #{tpu_custom_call.1} parent=1 // pred_check_branch
      %44 = sbr.rel (0) target = $region21
    $region20: #{tpu_custom_call.1} parent=1 // pred_region
      _
    $region21: #{tpu_custom_call.1} parent=1 // pred_fallthru
      _
    // Predicated region
    $region22: #{tpu_custom_call.1} parent=1 // pred_check
      _
    $region23: #{tpu_custom_call.1} parent=1 // pred_check_branch
      %46 = sbr.rel (0) target = $region25
    $region24: #{tpu_custom_call.1} parent=1 // pred_region
      _
    $region25: #{tpu_custom_call.1} parent=1 // pred_fallthru
      _
    // Predicated region
    $region26: #{tpu_custom_call.1} parent=1 // pred_check
      _
    $region27: #{tpu_custom_call.1} parent=1 // pred_check_branch
      %48 = sbr.rel (0) target = $region29
    $region28: #{tpu_custom_call.1} parent=1 // pred_region
      %s50 = ssub.s32 16, 16
      %51 = vsyncadd [#allocation6], %s50
      %s53 = sshll.u32 [#allocation5], 4
      %s54 = int_to_ptr.vmem [resolvable:$true] %s53
      %56 = dma.hbm_to_vmem [thread:$0]  %s6, 16, %s54, [#allocation6]
    $region29: #{tpu_custom_call.1} parent=1 // pred_fallthru
      _
    // Predicated region
    $region30: #{tpu_custom_call.1} parent=1 // pred_check
      _
    $region31: #{tpu_custom_call.1} parent=1 // pred_check_branch
      %58 = sbr.rel (0) target = $region33
    $region32: #{tpu_custom_call.1} parent=1 // pred_region
      _
    $region33: #{tpu_custom_call.1} parent=1 // pred_fallthru
      _
    // Predicated region
    $region34: #{tpu_custom_call.1} parent=1 // pred_check
      _
    $region35: #{tpu_custom_call.1} parent=1 // pred_check_branch
      %60 = sbr.rel (0) target = $region37
    $region36: #{tpu_custom_call.1} parent=1 // pred_region
      _
    $region37: #{tpu_custom_call.1} parent=1 // pred_fallthru
      _
    // Predicated region
    $region38: #{tpu_custom_call.1} parent=1 // pred_check
      _
    $region39: #{tpu_custom_call.1} parent=1 // pred_check_branch
      %62 = sbr.rel (0) target = $region41
    $region40: #{tpu_custom_call.1} parent=1 // pred_region
      %s64 = ssub.s32 16, 16
      %65 = vsyncadd [#allocation6], %s64
      %s67 = sshll.u32 [#allocation7], 4
      %s68 = int_to_ptr.vmem [resolvable:$true] %s67
      %70 = dma.hbm_to_vmem [thread:$0]  %s9, 16, %s68, [#allocation6]
    $region41: #{tpu_custom_call.1} parent=1 // pred_fallthru
      _
    // Predicated region
    $region42: #{tpu_custom_call.1} parent=1 // pred_check
      _
    $region43: #{tpu_custom_call.1} parent=1 // pred_check_branch
      %72 = sbr.rel (0) target = $region45
    $region44: #{tpu_custom_call.1} parent=1 // pred_region
      %s74 = ssub.s32 1024, 1024
      %75 = vsyncadd [#allocation9], %s74
      %s76 = sshll.u32 [#allocation8], 4
      %s77 = int_to_ptr.vmem [resolvable:$true] %s76
      %82 = dma.hbm_to_vmem [thread:$0]  %s10, 1024, %s77, [#allocation9], 128, 128, 8
    $region45: #{tpu_custom_call.1} parent=1 // pred_fallthru
      _
    // Predicated region
    $region46: #{tpu_custom_call.1} parent=1 // pred_check
      _
    $region47: #{tpu_custom_call.1} parent=1 // pred_check_branch
      %84 = sbr.rel (0) target = $region49
    $region48: #{tpu_custom_call.1} parent=1 // pred_region
      %s86 = ssub.s32 16, 16
      %87 = vsyncadd [#allocation9], %s86
      %s89 = sshll.u32 [#allocation10], 4
      %s90 = int_to_ptr.vmem [resolvable:$true] %s89
      %92 = dma.hbm_to_vmem [thread:$0]  %s11, 16, %s90, [#allocation9]
    $region49: #{tpu_custom_call.1} parent=1 // pred_fallthru
      _
    // Predicated region
    $region50: #{tpu_custom_call.1} parent=1 // pred_check
      _
    $region51: #{tpu_custom_call.1} parent=1 // pred_check_branch
      %94 = sbr.rel (0) target = $region53
    $region52: #{tpu_custom_call.1} parent=1 // pred_region
      _
    $region53: #{tpu_custom_call.1} parent=1 // pred_fallthru
      _
    // Predicated region
    $region54: #{tpu_custom_call.1} parent=1 // pred_check
      _
    $region55: #{tpu_custom_call.1} parent=1 // pred_check_branch
      %96 = sbr.rel (0) target = $region57
    $region56: #{tpu_custom_call.1} parent=1 // pred_region
      _
    $region57: #{tpu_custom_call.1} parent=1 // pred_fallthru
      _
    // Predicated region
    $region58: #{tpu_custom_call.1} parent=1 // pred_check
      _
    $region59: #{tpu_custom_call.1} parent=1 // pred_check_branch
      %98 = sbr.rel (0) target = $region61
    $region60: #{tpu_custom_call.1} parent=1 // pred_region
      _
    $region61: #{tpu_custom_call.1} parent=1 // pred_fallthru
      _
    // Predicated region
    $region62: #{tpu_custom_call.1} parent=1 // pred_check
      _
    $region63: #{tpu_custom_call.1} parent=1 // pred_check_branch
      %100 = sbr.rel (0) target = $region65
    $region64: #{tpu_custom_call.1} parent=1 // pred_region
      %s102 = ssub.s32 4096, 4096
      %103 = vsyncadd [#allocation12], %s102
      %s104 = sshll.u32 [#allocation11], 4
      %s105 = int_to_ptr.vmem [resolvable:$true] %s104
      %110 = dma.hbm_to_vmem [thread:$0]  %s15, 4096, %s105, [#allocation12], 256, 256, 16
    $region65: #{tpu_custom_call.1} parent=1 // pred_fallthru
      _
    // Predicated region
    $region66: #{tpu_custom_call.1} parent=1 // pred_check
      _
    $region67: #{tpu_custom_call.1} parent=1 // pred_check_branch
      %112 = sbr.rel (0) target = $region69
    $region68: #{tpu_custom_call.1} parent=1 // pred_region
      _
    $region69: #{tpu_custom_call.1} parent=1 // pred_fallthru
      _
    // Predicated region
    $region70: #{tpu_custom_call.1} parent=1 // pred_check
      _
    $region71: #{tpu_custom_call.1} parent=1 // pred_check_branch
      %114 = sbr.rel (0) target = $region73
    $region72: #{tpu_custom_call.1} parent=1 // pred_region
      %115 = dma.done [#allocation3], 16
    $region73: #{tpu_custom_call.1} parent=1 // pred_fallthru
      _
    // Predicated region
    $region74: #{tpu_custom_call.1} parent=1 // pred_check
      _
    $region75: #{tpu_custom_call.1} parent=1 // pred_check_branch
      %117 = sbr.rel (0) target = $region77
    $region76: #{tpu_custom_call.1} parent=1 // pred_region
      %118 = dma.done [#allocation6], 16
    $region77: #{tpu_custom_call.1} parent=1 // pred_fallthru
      _
    // Predicated region
    $region78: #{tpu_custom_call.1} parent=1 // pred_check
      _
    $region79: #{tpu_custom_call.1} parent=1 // pred_check_branch
      %120 = sbr.rel (0) target = $region81
    $region80: #{tpu_custom_call.1} parent=1 // pred_region
      %121 = dma.done [#allocation6], 16
    $region81: #{tpu_custom_call.1} parent=1 // pred_fallthru
      _
    // Predicated region
    $region82: #{tpu_custom_call.1} parent=1 // pred_check
      _
    $region83: #{tpu_custom_call.1} parent=1 // pred_check_branch
      %123 = sbr.rel (0) target = $region85
    $region84: #{tpu_custom_call.1} parent=1 // pred_region
      %124 = dma.done [#allocation9], 1024
    $region85: #{tpu_custom_call.1} parent=1 // pred_fallthru
      _
    // Predicated region
    $region86: #{tpu_custom_call.1} parent=1 // pred_check
      _
    $region87: #{tpu_custom_call.1} parent=1 // pred_check_branch
      %126 = sbr.rel (0) target = $region89
    $region88: #{tpu_custom_call.1} parent=1 // pred_region
      %127 = dma.done [#allocation9], 16
    $region89: #{tpu_custom_call.1} parent=1 // pred_fallthru
      _
    // Predicated region
    $region90: #{tpu_custom_call.1} parent=1 // pred_check
      _
    $region91: #{tpu_custom_call.1} parent=1 // pred_check_branch
      %129 = sbr.rel (0) target = $region93
    $region92: #{tpu_custom_call.1} parent=1 // pred_region
      %130 = dma.done [#allocation12], 4096
    $region93: #{tpu_custom_call.1} parent=1 // pred_fallthru
      _
    %v131 = vld [vmem:[%s0] sm:$0xff]
    %v132 = vld [vmem:[%s0 + $0x8] sm:$0xff]
    %v133 = vld [vmem:[%s0 + $0x10] sm:$0xff]
    %v134 = vld [vmem:[%s0 + $0x18] sm:$0xff]
    %v135 = vld [vmem:[%s0 + $0x20] sm:$0x3]
    %v136 = vld [vmem:[%s2] sm:$0x7]
    %v137 = vld [vmem:[#allocation2] sm:$0x1]
    %v139 = vlaneseq
    %v140 = vshrl.u32 %v139, 7
    %v141 = vsub.s32 0, %v140
    %v142 = vrot.slane %v137, %v141
    %vm144 = vcmask 23552
    %v146 = vsel %vm144, %v131, 0
    %v149 = vsel %vm144, %v132, 0
    %v152 = vsel %vm144, %v133, 0
    %v155 = vsel %vm144, %v134, 0
    %v158 = vsel %vm144, %v135, 0
    %vm160 = vcmask 1042432
    %v162 = vsel %vm160, %v136, 0
    %164 = vmatprep.subr.mxu0 0.0
    %165 = vmatpush1.msra.mxu0 %v162
    %166 = vmatprep.subr.mxu0 0.0
    %167 = vmatpush1.msra.mxu0 0.0
    %168 = vmatprep.subr.mxu0 0.0
    %169 = vmatpush1.msra.mxu0 0.0
    %170 = vmatprep.subr.mxu0 0.0
    %171 = vmatpush1.msra.mxu0 0.0
    %172 = vmatprep.subr.mxu0 0.0
    %173 = vmatpush1.msra.mxu0 0.0
    %174 = vmatprep.subr.mxu0 0.0
    %175 = vmatpush1.msra.mxu0 0.0
    %176 = vmatprep.subr.mxu0 0.0
    %177 = vmatpush1.msra.mxu0 0.0
    %178 = vmatprep.subr.mxu0 0.0
    %179 = vmatpush1.msra.mxu0 0.0
    %180 = vmatprep.subr.mxu0 0.0
    %181 = vmatpush1.msra.mxu0 0.0
    %182 = vmatprep.subr.mxu0 0.0
    %183 = vmatpush1.msra.mxu0 0.0
    %184 = vmatprep.subr.mxu0 0.0
    %185 = vmatpush1.msra.mxu0 0.0
    %186 = vmatprep.subr.mxu0 0.0
    %187 = vmatpush1.msra.mxu0 0.0
    %188 = vmatprep.subr.mxu0 0.0
    %189 = vmatpush1.msra.mxu0 0.0
    %190 = vmatprep.subr.mxu0 0.0
    %191 = vmatpush1.msra.mxu0 0.0
    %192 = vmatprep.subr.mxu0 0.0
    %193 = vmatpush1.msra.mxu0 0.0
    %194 = vmatprep.subr.mxu0 0.0
    %195 = vmatpush1.msra.mxu0 0.0
    %196 = vmatprep.subr.mxu0 0.0
    %197 = vmatpush1.msra.mxu0 0.0
    %198 = vmatprep.subr.mxu0 0.0
    %199 = vmatpush1.msra.mxu0 0.0
    %200 = vmatprep.subr.mxu0 0.0
    %201 = vmatpush1.msra.mxu0 0.0
    %202 = vmatprep.subr.mxu0 0.0
    %203 = vmatpush1.msra.mxu0 0.0
    %204 = vmatprep.subr.mxu0 0.0
    %205 = vmatpush1.msra.mxu0 0.0
    %206 = vmatprep.subr.mxu0 0.0
    %207 = vmatpush1.msra.mxu0 0.0
    %208 = vmatprep.subr.mxu0 0.0
    %209 = vmatpush1.msra.mxu0 0.0
    %210 = vmatprep.subr.mxu0 0.0
    %211 = vmatpush1.msra.mxu0 0.0
    %212 = vmatprep.subr.mxu0 0.0
    %213 = vmatpush1.msra.mxu0 0.0
    %214 = vmatprep.subr.mxu0 0.0
    %215 = vmatpush1.msra.mxu0 0.0
    %216 = vmatprep.subr.mxu0 0.0
    %217 = vmatpush1.msra.mxu0 0.0
    %218 = vmatprep.subr.mxu0 0.0
    %219 = vmatpush1.msra.mxu0 0.0
    %220 = vmatprep.subr.mxu0 0.0
    %221 = vmatpush1.msra.mxu0 0.0
    %222 = vmatprep.subr.mxu0 0.0
    %223 = vmatpush1.msra.mxu0 0.0
    %224 = vmatprep.subr.mxu0 0.0
    %225 = vmatpush1.msra.mxu0 0.0
    %226 = vmatprep.subr.mxu0 0.0
    %227 = vmatpush1.msra.mxu0 0.0
    %228 = vmatprep.mubr.f32.mxu0 0.0
    %229 = vmatmul.mubr.f32.gmra.mrb[0].mxu0 %v146
    %v230 = vpop.f32.mrb[0].mxu0
    %v231 = vadd.f32 %v142, %v230
    %v232 = vpop.f32.mrb[0].mxu0
    %233 = vmatprep.mubr.f32.mxu0 0.0
    %234 = vmatmul.mubr.f32.gmra.mrb[0].mxu0 %v149
    %v235 = vpop.f32.mrb[0].mxu0
    %v236 = vadd.f32 %v142, %v235
    %v237 = vpop.f32.mrb[0].mxu0
    %238 = vmatprep.mubr.f32.mxu0 0.0
    %239 = vmatmul.mubr.f32.gmra.mrb[0].mxu0 %v152
    %v240 = vpop.f32.mrb[0].mxu0
    %v241 = vadd.f32 %v142, %v240
    %v242 = vpop.f32.mrb[0].mxu0
    %243 = vmatprep.mubr.f32.mxu0 0.0
    %244 = vmatmul.mubr.f32.gmra.mrb[0].mxu0 %v155
    %v245 = vpop.f32.mrb[0].mxu0
    %v246 = vadd.f32 %v142, %v245
    %v247 = vpop.f32.mrb[0].mxu0
    %248 = vmatprep.mubr.f32.mxu0 0.0
    %249 = vmatmul.mubr.f32.gmra.mrb[0].mxu0 %v158
    %v250 = vpop.f32.mrb[0].mxu0
    %v251 = vadd.f32 %v142, %v250
    %v252 = vpop.f32.mrb[0].mxu0
    %253 = vdwg.mxu0
    %v254 = vld [vmem:[%s1] sm:$0xff]
    %v255 = vld [vmem:[%s1 + $0x8] sm:$0xff]
    %v256 = vld [vmem:[%s1 + $0x10] sm:$0xff]
    %v257 = vld [vmem:[%s1 + $0x18] sm:$0xff]
    %v258 = vld [vmem:[%s1 + $0x20] sm:$0x3]
    %vm259 = vcmask 277504
    %v261 = vsel %vm259, %v254, 0
    %v264 = vsel %vm259, %v255, 0
    %v267 = vsel %vm259, %v256, 0
    %v270 = vsel %vm259, %v257, 0
    %v273 = vsel %vm259, %v258, 0
    %vm275 = vcmask 1041408
    %v277 = vsel %vm275, %v251, 0
    %279 = vmatprep.subr.mxu0 0.0
    %280 = vmatpush1.msra.mxu0 %v231
    %281 = vmatprep.subr.mxu0 0.0
    %282 = vmatpush1.msra.mxu0 %v236
    %283 = vmatprep.subr.mxu0 0.0
    %284 = vmatpush1.msra.mxu0 %v241
    %285 = vmatprep.subr.mxu0 0.0
    %286 = vmatpush1.msra.mxu0 %v246
    %287 = vmatprep.subr.mxu0 0.0
    %288 = vmatpush1.msra.mxu0 %v277
    %289 = vmatprep.subr.mxu0 0.0
    %290 = vmatpush1.msra.mxu0 0.0
    %291 = vmatprep.subr.mxu0 0.0
    %292 = vmatpush1.msra.mxu0 0.0
    %293 = vmatprep.subr.mxu0 0.0
    %294 = vmatpush1.msra.mxu0 0.0
    %295 = vmatprep.subr.mxu0 0.0
    %296 = vmatpush1.msra.mxu0 0.0
    %297 = vmatprep.subr.mxu0 0.0
    %298 = vmatpush1.msra.mxu0 0.0
    %299 = vmatprep.subr.mxu0 0.0
    %300 = vmatpush1.msra.mxu0 0.0
    %301 = vmatprep.subr.mxu0 0.0
    %302 = vmatpush1.msra.mxu0 0.0
    %303 = vmatprep.subr.mxu0 0.0
    %304 = vmatpush1.msra.mxu0 0.0
    %305 = vmatprep.subr.mxu0 0.0
    %306 = vmatpush1.msra.mxu0 0.0
    %307 = vmatprep.subr.mxu0 0.0
    %308 = vmatpush1.msra.mxu0 0.0
    %309 = vmatprep.subr.mxu0 0.0
    %310 = vmatpush1.msra.mxu0 0.0
    %311 = vmatprep.subr.mxu0 0.0
    %312 = vmatpush1.msra.mxu0 0.0
    %313 = vmatprep.subr.mxu0 0.0
    %314 = vmatpush1.msra.mxu0 0.0
    %315 = vmatprep.subr.mxu0 0.0
    %316 = vmatpush1.msra.mxu0 0.0
    %317 = vmatprep.subr.mxu0 0.0
    %318 = vmatpush1.msra.mxu0 0.0
    %319 = vmatprep.subr.mxu0 0.0
    %320 = vmatpush1.msra.mxu0 0.0
    %321 = vmatprep.subr.mxu0 0.0
    %322 = vmatpush1.msra.mxu0 0.0
    %323 = vmatprep.subr.mxu0 0.0
    %324 = vmatpush1.msra.mxu0 0.0
    %325 = vmatprep.subr.mxu0 0.0
    %326 = vmatpush1.msra.mxu0 0.0
    %327 = vmatprep.subr.mxu0 0.0
    %328 = vmatpush1.msra.mxu0 0.0
    %329 = vmatprep.subr.mxu0 0.0
    %330 = vmatpush1.msra.mxu0 0.0
    %331 = vmatprep.subr.mxu0 0.0
    %332 = vmatpush1.msra.mxu0 0.0
    %333 = vmatprep.subr.mxu0 0.0
    %334 = vmatpush1.msra.mxu0 0.0
    %335 = vmatprep.subr.mxu0 0.0
    %336 = vmatpush1.msra.mxu0 0.0
    %337 = vmatprep.subr.mxu0 0.0
    %338 = vmatpush1.msra.mxu0 0.0
    %339 = vmatprep.subr.mxu0 0.0
    %340 = vmatpush1.msra.mxu0 0.0
    %341 = vmatprep.subr.mxu0 0.0
    %342 = vmatpush1.msra.mxu0 0.0
    %343 = vmatprep.mubr.f32.mxu0 0.0
    %344 = vmatmul.mubr.f32.gmra.mrb[0].mxu0 %v261
    %v345 = vpop.f32.mrb[0].mxu0
    %v346 = vadd.f32 0.0, %v345
    %v347 = vpop.f32.mrb[0].mxu0
    %348 = vmatprep.mubr.f32.mxu0 0.0
    %349 = vmatmul.mubr.f32.gmra.mrb[0].mxu0 %v264
    %v350 = vpop.f32.mrb[0].mxu0
    %v351 = vadd.f32 0.0, %v350
    %v352 = vpop.f32.mrb[0].mxu0
    %353 = vmatprep.mubr.f32.mxu0 0.0
    %354 = vmatmul.mubr.f32.gmra.mrb[0].mxu0 %v267
    %v355 = vpop.f32.mrb[0].mxu0
    %v356 = vadd.f32 0.0, %v355
    %v357 = vpop.f32.mrb[0].mxu0
    %358 = vmatprep.mubr.f32.mxu0 0.0
    %359 = vmatmul.mubr.f32.gmra.mrb[0].mxu0 %v270
    %v360 = vpop.f32.mrb[0].mxu0
    %v361 = vadd.f32 0.0, %v360
    %v362 = vpop.f32.mrb[0].mxu0
    %363 = vmatprep.mubr.f32.mxu0 0.0
    %364 = vmatmul.mubr.f32.gmra.mrb[0].mxu0 %v273
    %v365 = vpop.f32.mrb[0].mxu0
    %v366 = vadd.f32 0.0, %v365
    %v367 = vpop.f32.mrb[0].mxu0
    %368 = vdwg.mxu0
    %v369 = vmax.f32 %v346, 0.0
    %v370 = vmax.f32 %v351, 0.0
    %v371 = vmax.f32 %v356, 0.0
    %v372 = vmax.f32 %v361, 0.0
    %v373 = vmax.f32 %v366, 0.0
    %v374 = vld [vmem:[%s5] sm:$0xff]
    %v375 = vld [vmem:[%s5 + $0x8] sm:$0xff]
    %v376 = vld [vmem:[%s5 + $0x10] sm:$0xff]
    %v377 = vld [vmem:[%s5 + $0x18] sm:$0xff]
    %v378 = vld [vmem:[%s5 + $0x20] sm:$0xff]
    %v379 = vld [vmem:[%s5 + $0x28] sm:$0xff]
    %v380 = vld [vmem:[%s5 + $0x30] sm:$0xff]
    %v381 = vld [vmem:[%s5 + $0x38] sm:$0xff]
    %v382 = vld [vmem:[#allocation5] sm:$0x1]
    %v384 = vlaneseq
    %v385 = vshrl.u32 %v384, 7
    %v386 = vsub.s32 0, %v385
    %v387 = vrot.slane %v382, %v386
    %vm389 = vcmask 523264
    %v391 = vsel %vm389, %v369, 0
    %v394 = vsel %vm389, %v370, 0
    %v397 = vsel %vm389, %v371, 0
    %v400 = vsel %vm389, %v372, 0
    %v403 = vsel %vm389, %v373, 0
    %405 = vmatprep.subr.mxu0 0.0
    %406 = vmatpush1.msra.mxu0 %v374
    %407 = vmatprep.subr.mxu0 0.0
    %408 = vmatpush1.msra.mxu0 %v375
    %409 = vmatprep.subr.mxu0 0.0
    %410 = vmatpush1.msra.mxu0 %v376
    %411 = vmatprep.subr.mxu0 0.0
    %412 = vmatpush1.msra.mxu0 %v377
    %413 = vmatprep.subr.mxu0 0.0
    %414 = vmatpush1.msra.mxu0 %v378
    %415 = vmatprep.subr.mxu0 0.0
    %416 = vmatpush1.msra.mxu0 %v379
    %417 = vmatprep.subr.mxu0 0.0
    %418 = vmatpush1.msra.mxu0 %v380
    %419 = vmatprep.subr.mxu0 0.0
    %420 = vmatpush1.msra.mxu0 %v381
    %421 = vmatprep.subr.mxu0 0.0
    %422 = vmatpush1.msra.mxu0 0.0
    %423 = vmatprep.subr.mxu0 0.0
    %424 = vmatpush1.msra.mxu0 0.0
    %425 = vmatprep.subr.mxu0 0.0
    %426 = vmatpush1.msra.mxu0 0.0
    %427 = vmatprep.subr.mxu0 0.0
    %428 = vmatpush1.msra.mxu0 0.0
    %429 = vmatprep.subr.mxu0 0.0
    %430 = vmatpush1.msra.mxu0 0.0
    %431 = vmatprep.subr.mxu0 0.0
    %432 = vmatpush1.msra.mxu0 0.0
    %433 = vmatprep.subr.mxu0 0.0
    %434 = vmatpush1.msra.mxu0 0.0
    %435 = vmatprep.subr.mxu0 0.0
    %436 = vmatpush1.msra.mxu0 0.0
    %437 = vmatprep.subr.mxu0 0.0
    %438 = vmatpush1.msra.mxu0 0.0
    %439 = vmatprep.subr.mxu0 0.0
    %440 = vmatpush1.msra.mxu0 0.0
    %441 = vmatprep.subr.mxu0 0.0
    %442 = vmatpush1.msra.mxu0 0.0
    %443 = vmatprep.subr.mxu0 0.0
    %444 = vmatpush1.msra.mxu0 0.0
    %445 = vmatprep.subr.mxu0 0.0
    %446 = vmatpush1.msra.mxu0 0.0
    %447 = vmatprep.subr.mxu0 0.0
    %448 = vmatpush1.msra.mxu0 0.0
    %449 = vmatprep.subr.mxu0 0.0
    %450 = vmatpush1.msra.mxu0 0.0
    %451 = vmatprep.subr.mxu0 0.0
    %452 = vmatpush1.msra.mxu0 0.0
    %453 = vmatprep.subr.mxu0 0.0
    %454 = vmatpush1.msra.mxu0 0.0
    %455 = vmatprep.subr.mxu0 0.0
    %456 = vmatpush1.msra.mxu0 0.0
    %457 = vmatprep.subr.mxu0 0.0
    %458 = vmatpush1.msra.mxu0 0.0
    %459 = vmatprep.subr.mxu0 0.0
    %460 = vmatpush1.msra.mxu0 0.0
    %461 = vmatprep.subr.mxu0 0.0
    %462 = vmatpush1.msra.mxu0 0.0
    %463 = vmatprep.subr.mxu0 0.0
    %464 = vmatpush1.msra.mxu0 0.0
    %465 = vmatprep.subr.mxu0 0.0
    %466 = vmatpush1.msra.mxu0 0.0
    %467 = vmatprep.subr.mxu0 0.0
    %468 = vmatpush1.msra.mxu0 0.0
    %469 = vmatprep.mubr.f32.mxu0 0.0
    %470 = vmatmul.mubr.f32.gmra.mrb[0].mxu0 %v391
    %v471 = vpop.f32.mrb[0].mxu0
    %v472 = vadd.f32 %v387, %v471
    %v473 = vpop.f32.mrb[0].mxu0
    %474 = vmatprep.mubr.f32.mxu0 0.0
    %475 = vmatmul.mubr.f32.gmra.mrb[0].mxu0 %v394
    %v476 = vpop.f32.mrb[0].mxu0
    %v477 = vadd.f32 %v387, %v476
    %v478 = vpop.f32.mrb[0].mxu0
    %479 = vmatprep.mubr.f32.mxu0 0.0
    %480 = vmatmul.mubr.f32.gmra.mrb[0].mxu0 %v397
    %v481 = vpop.f32.mrb[0].mxu0
    %v482 = vadd.f32 %v387, %v481
    %v483 = vpop.f32.mrb[0].mxu0
    %484 = vmatprep.mubr.f32.mxu0 0.0
    %485 = vmatmul.mubr.f32.gmra.mrb[0].mxu0 %v400
    %v486 = vpop.f32.mrb[0].mxu0
    %v487 = vadd.f32 %v387, %v486
    %v488 = vpop.f32.mrb[0].mxu0
    %489 = vmatprep.mubr.f32.mxu0 0.0
    %490 = vmatmul.mubr.f32.gmra.mrb[0].mxu0 %v403
    %v491 = vpop.f32.mrb[0].mxu0
    %v492 = vadd.f32 %v387, %v491
    %v493 = vpop.f32.mrb[0].mxu0
    %494 = vdwg.mxu0
    %v495 = vld [vmem:[%s4] sm:$0xff]
    %v496 = vld [vmem:[%s4 + $0x8] sm:$0xff]
    %v497 = vld [vmem:[%s4 + $0x10] sm:$0xff]
    %v498 = vld [vmem:[%s4 + $0x18] sm:$0xff]
    %v499 = vld [vmem:[%s4 + $0x20] sm:$0x3]
    %v501 = vsel %vm259, %v495, 0
    %v504 = vsel %vm259, %v496, 0
    %v507 = vsel %vm259, %v497, 0
    %v510 = vsel %vm259, %v498, 0
    %v513 = vsel %vm259, %v499, 0
    %v516 = vsel %vm275, %v492, 0
    %518 = vmatprep.subr.mxu0 0.0
    %519 = vmatpush1.msra.mxu0 %v472
    %520 = vmatprep.subr.mxu0 0.0
    %521 = vmatpush1.msra.mxu0 %v477
    %522 = vmatprep.subr.mxu0 0.0
    %523 = vmatpush1.msra.mxu0 %v482
    %524 = vmatprep.subr.mxu0 0.0
    %525 = vmatpush1.msra.mxu0 %v487
    %526 = vmatprep.subr.mxu0 0.0
    %527 = vmatpush1.msra.mxu0 %v516
    %528 = vmatprep.subr.mxu0 0.0
    %529 = vmatpush1.msra.mxu0 0.0
    %530 = vmatprep.subr.mxu0 0.0
    %531 = vmatpush1.msra.mxu0 0.0
    %532 = vmatprep.subr.mxu0 0.0
    %533 = vmatpush1.msra.mxu0 0.0
    %534 = vmatprep.subr.mxu0 0.0
    %535 = vmatpush1.msra.mxu0 0.0
    %536 = vmatprep.subr.mxu0 0.0
    %537 = vmatpush1.msra.mxu0 0.0
    %538 = vmatprep.subr.mxu0 0.0
    %539 = vmatpush1.msra.mxu0 0.0
    %540 = vmatprep.subr.mxu0 0.0
    %541 = vmatpush1.msra.mxu0 0.0
    %542 = vmatprep.subr.mxu0 0.0
    %543 = vmatpush1.msra.mxu0 0.0
    %544 = vmatprep.subr.mxu0 0.0
    %545 = vmatpush1.msra.mxu0 0.0
    %546 = vmatprep.subr.mxu0 0.0
    %547 = vmatpush1.msra.mxu0 0.0
    %548 = vmatprep.subr.mxu0 0.0
    %549 = vmatpush1.msra.mxu0 0.0
    %550 = vmatprep.subr.mxu0 0.0
    %551 = vmatpush1.msra.mxu0 0.0
    %552 = vmatprep.subr.mxu0 0.0
    %553 = vmatpush1.msra.mxu0 0.0
    %554 = vmatprep.subr.mxu0 0.0
    %555 = vmatpush1.msra.mxu0 0.0
    %556 = vmatprep.subr.mxu0 0.0
    %557 = vmatpush1.msra.mxu0 0.0
    %558 = vmatprep.subr.mxu0 0.0
    %559 = vmatpush1.msra.mxu0 0.0
    %560 = vmatprep.subr.mxu0 0.0
    %561 = vmatpush1.msra.mxu0 0.0
    %562 = vmatprep.subr.mxu0 0.0
    %563 = vmatpush1.msra.mxu0 0.0
    %564 = vmatprep.subr.mxu0 0.0
    %565 = vmatpush1.msra.mxu0 0.0
    %566 = vmatprep.subr.mxu0 0.0
    %567 = vmatpush1.msra.mxu0 0.0
    %568 = vmatprep.subr.mxu0 0.0
    %569 = vmatpush1.msra.mxu0 0.0
    %570 = vmatprep.subr.mxu0 0.0
    %571 = vmatpush1.msra.mxu0 0.0
    %572 = vmatprep.subr.mxu0 0.0
    %573 = vmatpush1.msra.mxu0 0.0
    %574 = vmatprep.subr.mxu0 0.0
    %575 = vmatpush1.msra.mxu0 0.0
    %576 = vmatprep.subr.mxu0 0.0
    %577 = vmatpush1.msra.mxu0 0.0
    %578 = vmatprep.subr.mxu0 0.0
    %579 = vmatpush1.msra.mxu0 0.0
    %580 = vmatprep.subr.mxu0 0.0
    %581 = vmatpush1.msra.mxu0 0.0
    %582 = vmatprep.mubr.f32.mxu0 0.0
    %583 = vmatmul.mubr.f32.gmra.mrb[0].mxu0 %v501
    %v584 = vpop.f32.mrb[0].mxu0
    %v585 = vadd.f32 %v369, %v584
    %v586 = vpop.f32.mrb[0].mxu0
    %587 = vmatprep.mubr.f32.mxu0 0.0
    %588 = vmatmul.mubr.f32.gmra.mrb[0].mxu0 %v504
    %v589 = vpop.f32.mrb[0].mxu0
    %v590 = vadd.f32 %v370, %v589
    %v591 = vpop.f32.mrb[0].mxu0
    %592 = vmatprep.mubr.f32.mxu0 0.0
    %593 = vmatmul.mubr.f32.gmra.mrb[0].mxu0 %v507
    %v594 = vpop.f32.mrb[0].mxu0
    %v595 = vadd.f32 %v371, %v594
    %v596 = vpop.f32.mrb[0].mxu0
    %597 = vmatprep.mubr.f32.mxu0 0.0
    %598 = vmatmul.mubr.f32.gmra.mrb[0].mxu0 %v510
    %v599 = vpop.f32.mrb[0].mxu0
    %v600 = vadd.f32 %v372, %v599
    %v601 = vpop.f32.mrb[0].mxu0
    %602 = vmatprep.mubr.f32.mxu0 0.0
    %603 = vmatmul.mubr.f32.gmra.mrb[0].mxu0 %v513
    %v604 = vpop.f32.mrb[0].mxu0
    %v605 = vadd.f32 %v373, %v604
    %v606 = vpop.f32.mrb[0].mxu0
    %607 = vdwg.mxu0
    %v608 = vmax.f32 %v585, 0.0
    %v609 = vmax.f32 %v590, 0.0
    %v610 = vmax.f32 %v595, 0.0
    %v611 = vmax.f32 %v600, 0.0
    %v612 = vmax.f32 %v605, 0.0
    %v613 = vld [vmem:[%s8] sm:$0xff]
    %v614 = vld [vmem:[%s8 + $0x8] sm:$0xff]
    %v615 = vld [vmem:[%s8 + $0x10] sm:$0xff]
    %v616 = vld [vmem:[%s8 + $0x18] sm:$0xff]
    %v617 = vld [vmem:[%s8 + $0x20] sm:$0xff]
    %v618 = vld [vmem:[%s8 + $0x28] sm:$0xff]
    %v619 = vld [vmem:[%s8 + $0x30] sm:$0xff]
    %v620 = vld [vmem:[%s8 + $0x38] sm:$0xff]
    %v621 = vld [vmem:[#allocation7] sm:$0x1]
    %v623 = vlaneseq
    %v624 = vshrl.u32 %v623, 7
    %v625 = vsub.s32 0, %v624
    %v626 = vrot.slane %v621, %v625
    %v629 = vsel %vm389, %v608, 0
    %v632 = vsel %vm389, %v609, 0
    %v635 = vsel %vm389, %v610, 0
    %v638 = vsel %vm389, %v611, 0
    %v641 = vsel %vm389, %v612, 0
    %643 = vmatprep.subr.mxu0 0.0
    %644 = vmatpush1.msra.mxu0 %v613
    %645 = vmatprep.subr.mxu0 0.0
    %646 = vmatpush1.msra.mxu0 %v614
    %647 = vmatprep.subr.mxu0 0.0
    %648 = vmatpush1.msra.mxu0 %v615
    %649 = vmatprep.subr.mxu0 0.0
    %650 = vmatpush1.msra.mxu0 %v616
    %651 = vmatprep.subr.mxu0 0.0
    %652 = vmatpush1.msra.mxu0 %v617
    %653 = vmatprep.subr.mxu0 0.0
    %654 = vmatpush1.msra.mxu0 %v618
    %655 = vmatprep.subr.mxu0 0.0
    %656 = vmatpush1.msra.mxu0 %v619
    %657 = vmatprep.subr.mxu0 0.0
    %658 = vmatpush1.msra.mxu0 %v620
    %659 = vmatprep.subr.mxu0 0.0
    %660 = vmatpush1.msra.mxu0 0.0
    %661 = vmatprep.subr.mxu0 0.0
    %662 = vmatpush1.msra.mxu0 0.0
    %663 = vmatprep.subr.mxu0 0.0
    %664 = vmatpush1.msra.mxu0 0.0
    %665 = vmatprep.subr.mxu0 0.0
    %666 = vmatpush1.msra.mxu0 0.0
    %667 = vmatprep.subr.mxu0 0.0
    %668 = vmatpush1.msra.mxu0 0.0
    %669 = vmatprep.subr.mxu0 0.0
    %670 = vmatpush1.msra.mxu0 0.0
    %671 = vmatprep.subr.mxu0 0.0
    %672 = vmatpush1.msra.mxu0 0.0
    %673 = vmatprep.subr.mxu0 0.0
    %674 = vmatpush1.msra.mxu0 0.0
    %675 = vmatprep.subr.mxu0 0.0
    %676 = vmatpush1.msra.mxu0 0.0
    %677 = vmatprep.subr.mxu0 0.0
    %678 = vmatpush1.msra.mxu0 0.0
    %679 = vmatprep.subr.mxu0 0.0
    %680 = vmatpush1.msra.mxu0 0.0
    %681 = vmatprep.subr.mxu0 0.0
    %682 = vmatpush1.msra.mxu0 0.0
    %683 = vmatprep.subr.mxu0 0.0
    %684 = vmatpush1.msra.mxu0 0.0
    %685 = vmatprep.subr.mxu0 0.0
    %686 = vmatpush1.msra.mxu0 0.0
    %687 = vmatprep.subr.mxu0 0.0
    %688 = vmatpush1.msra.mxu0 0.0
    %689 = vmatprep.subr.mxu0 0.0
    %690 = vmatpush1.msra.mxu0 0.0
    %691 = vmatprep.subr.mxu0 0.0
    %692 = vmatpush1.msra.mxu0 0.0
    %693 = vmatprep.subr.mxu0 0.0
    %694 = vmatpush1.msra.mxu0 0.0
    %695 = vmatprep.subr.mxu0 0.0
    %696 = vmatpush1.msra.mxu0 0.0
    %697 = vmatprep.subr.mxu0 0.0
    %698 = vmatpush1.msra.mxu0 0.0
    %699 = vmatprep.subr.mxu0 0.0
    %700 = vmatpush1.msra.mxu0 0.0
    %701 = vmatprep.subr.mxu0 0.0
    %702 = vmatpush1.msra.mxu0 0.0
    %703 = vmatprep.subr.mxu0 0.0
    %704 = vmatpush1.msra.mxu0 0.0
    %705 = vmatprep.subr.mxu0 0.0
    %706 = vmatpush1.msra.mxu0 0.0
    %707 = vmatprep.mubr.f32.mxu0 0.0
    %708 = vmatmul.mubr.f32.gmra.mrb[0].mxu0 %v629
    %v709 = vpop.f32.mrb[0].mxu0
    %v710 = vadd.f32 %v626, %v709
    %v711 = vpop.f32.mrb[0].mxu0
    %712 = vmatprep.mubr.f32.mxu0 0.0
    %713 = vmatmul.mubr.f32.gmra.mrb[0].mxu0 %v632
    %v714 = vpop.f32.mrb[0].mxu0
    %v715 = vadd.f32 %v626, %v714
    %v716 = vpop.f32.mrb[0].mxu0
    %717 = vmatprep.mubr.f32.mxu0 0.0
    %718 = vmatmul.mubr.f32.gmra.mrb[0].mxu0 %v635
    %v719 = vpop.f32.mrb[0].mxu0
    %v720 = vadd.f32 %v626, %v719
    %v721 = vpop.f32.mrb[0].mxu0
    %722 = vmatprep.mubr.f32.mxu0 0.0
    %723 = vmatmul.mubr.f32.gmra.mrb[0].mxu0 %v638
    %v724 = vpop.f32.mrb[0].mxu0
    %v725 = vadd.f32 %v626, %v724
    %v726 = vpop.f32.mrb[0].mxu0
    %727 = vmatprep.mubr.f32.mxu0 0.0
    %728 = vmatmul.mubr.f32.gmra.mrb[0].mxu0 %v641
    %v729 = vpop.f32.mrb[0].mxu0
    %v730 = vadd.f32 %v626, %v729
    %v731 = vpop.f32.mrb[0].mxu0
    %732 = vdwg.mxu0
    %v733 = vld [vmem:[%s7] sm:$0xff]
    %v734 = vld [vmem:[%s7 + $0x8] sm:$0xff]
    %v735 = vld [vmem:[%s7 + $0x10] sm:$0xff]
    %v736 = vld [vmem:[%s7 + $0x18] sm:$0xff]
    %v737 = vld [vmem:[%s7 + $0x20] sm:$0x3]
    %v738 = vld [vmem:[#allocation8] sm:$0xff]
    %v739 = vld [vmem:[#allocation8 + $0x8] sm:$0xff]
    %v740 = vld [vmem:[#allocation8 + $0x10] sm:$0xff]
    %v741 = vld [vmem:[#allocation8 + $0x18] sm:$0xff]
    %v742 = vld [vmem:[#allocation8 + $0x20] sm:$0xff]
    %v743 = vld [vmem:[#allocation8 + $0x28] sm:$0xff]
    %v744 = vld [vmem:[#allocation8 + $0x30] sm:$0xff]
    %v745 = vld [vmem:[#allocation8 + $0x38] sm:$0xff]
    %746 = vmatprep.subr.mxu0 0.0
    %747 = vmatpush1.msra.mxu0 %v738
    %748 = vmatprep.subr.mxu0 0.0
    %749 = vmatpush1.msra.mxu0 %v739
    %750 = vmatprep.subr.mxu0 0.0
    %751 = vmatpush1.msra.mxu0 %v740
    %752 = vmatprep.subr.mxu0 0.0
    %753 = vmatpush1.msra.mxu0 %v741
    %754 = vmatprep.subr.mxu0 0.0
    %755 = vmatpush1.msra.mxu0 %v742
    %756 = vmatprep.subr.mxu0 0.0
    %757 = vmatpush1.msra.mxu0 %v743
    %758 = vmatprep.subr.mxu0 0.0
    %759 = vmatpush1.msra.mxu0 %v744
    %760 = vmatprep.subr.mxu0 0.0
    %761 = vmatpush1.msra.mxu0 %v745
    %762 = vmatprep.subr.mxu0 0.0
    %763 = vmatpush1.msra.mxu0 0.0
    %764 = vmatprep.subr.mxu0 0.0
    %765 = vmatpush1.msra.mxu0 0.0
    %766 = vmatprep.subr.mxu0 0.0
    %767 = vmatpush1.msra.mxu0 0.0
    %768 = vmatprep.subr.mxu0 0.0
    %769 = vmatpush1.msra.mxu0 0.0
    %770 = vmatprep.subr.mxu0 0.0
    %771 = vmatpush1.msra.mxu0 0.0
    %772 = vmatprep.subr.mxu0 0.0
    %773 = vmatpush1.msra.mxu0 0.0
    %774 = vmatprep.subr.mxu0 0.0
    %775 = vmatpush1.msra.mxu0 0.0
    %776 = vmatprep.subr.mxu0 0.0
    %777 = vmatpush1.msra.mxu0 0.0
    %778 = vmatprep.subr.mxu0 0.0
    %779 = vmatpush1.msra.mxu0 0.0
    %780 = vmatprep.subr.mxu0 0.0
    %781 = vmatpush1.msra.mxu0 0.0
    %782 = vmatprep.subr.mxu0 0.0
    %783 = vmatpush1.msra.mxu0 0.0
    %784 = vmatprep.subr.mxu0 0.0
    %785 = vmatpush1.msra.mxu0 0.0
    %786 = vmatprep.subr.mxu0 0.0
    %787 = vmatpush1.msra.mxu0 0.0
    %788 = vmatprep.subr.mxu0 0.0
    %789 = vmatpush1.msra.mxu0 0.0
    %790 = vmatprep.subr.mxu0 0.0
    %791 = vmatpush1.msra.mxu0 0.0
    %792 = vmatprep.subr.mxu0 0.0
    %793 = vmatpush1.msra.mxu0 0.0
    %794 = vmatprep.subr.mxu0 0.0
    %795 = vmatpush1.msra.mxu0 0.0
    %796 = vmatprep.subr.mxu0 0.0
    %797 = vmatpush1.msra.mxu0 0.0
    %798 = vmatprep.subr.mxu0 0.0
    %799 = vmatpush1.msra.mxu0 0.0
    %800 = vmatprep.subr.mxu0 0.0
    %801 = vmatpush1.msra.mxu0 0.0
    %802 = vmatprep.subr.mxu0 0.0
    %803 = vmatpush1.msra.mxu0 0.0
    %804 = vmatprep.subr.mxu0 0.0
    %805 = vmatpush1.msra.mxu0 0.0
    %806 = vmatprep.subr.mxu0 0.0
    %807 = vmatpush1.msra.mxu0 0.0
    %808 = vmatprep.subr.mxu0 0.0
    %809 = vmatpush1.msra.mxu0 0.0
    %810 = vmatprep.mubr.f32.mxu0 0.0
    %811 = vmatmul.mubr.f32.gmra.mrb[0].mxu0 %v629
    %v812 = vpop.f32.mrb[0].mxu0
    %v813 = vadd.f32 0.0, %v812
    %v814 = vpop.f32.mrb[0].mxu0
    %815 = vmatprep.mubr.f32.mxu0 0.0
    %816 = vmatmul.mubr.f32.gmra.mrb[0].mxu0 %v632
    %v817 = vpop.f32.mrb[0].mxu0
    %v818 = vadd.f32 0.0, %v817
    %v819 = vpop.f32.mrb[0].mxu0
    %820 = vmatprep.mubr.f32.mxu0 0.0
    %821 = vmatmul.mubr.f32.gmra.mrb[0].mxu0 %v635
    %v822 = vpop.f32.mrb[0].mxu0
    %v823 = vadd.f32 0.0, %v822
    %v824 = vpop.f32.mrb[0].mxu0
    %825 = vmatprep.mubr.f32.mxu0 0.0
    %826 = vmatmul.mubr.f32.gmra.mrb[0].mxu0 %v638
    %v827 = vpop.f32.mrb[0].mxu0
    %v828 = vadd.f32 0.0, %v827
    %v829 = vpop.f32.mrb[0].mxu0
    %830 = vmatprep.mubr.f32.mxu0 0.0
    %831 = vmatmul.mubr.f32.gmra.mrb[0].mxu0 %v641
    %v832 = vpop.f32.mrb[0].mxu0
    %v833 = vadd.f32 0.0, %v832
    %v834 = vpop.f32.mrb[0].mxu0
    %835 = vdwg.mxu0
    %v837 = vsel %vm259, %v733, 0
    %v840 = vsel %vm259, %v734, 0
    %v843 = vsel %vm259, %v735, 0
    %v846 = vsel %vm259, %v736, 0
    %v849 = vsel %vm259, %v737, 0
    %v852 = vsel %vm275, %v730, 0
    %854 = vmatprep.subr.mxu0 0.0
    %855 = vmatpush1.msra.mxu0 %v710
    %856 = vmatprep.subr.mxu0 0.0
    %857 = vmatpush1.msra.mxu0 %v715
    %858 = vmatprep.subr.mxu0 0.0
    %859 = vmatpush1.msra.mxu0 %v720
    %860 = vmatprep.subr.mxu0 0.0
    %861 = vmatpush1.msra.mxu0 %v725
    %862 = vmatprep.subr.mxu0 0.0
    %863 = vmatpush1.msra.mxu0 %v852
    %864 = vmatprep.subr.mxu0 0.0
    %865 = vmatpush1.msra.mxu0 0.0
    %866 = vmatprep.subr.mxu0 0.0
    %867 = vmatpush1.msra.mxu0 0.0
    %868 = vmatprep.subr.mxu0 0.0
    %869 = vmatpush1.msra.mxu0 0.0
    %870 = vmatprep.subr.mxu0 0.0
    %871 = vmatpush1.msra.mxu0 0.0
    %872 = vmatprep.subr.mxu0 0.0
    %873 = vmatpush1.msra.mxu0 0.0
    %874 = vmatprep.subr.mxu0 0.0
    %875 = vmatpush1.msra.mxu0 0.0
    %876 = vmatprep.subr.mxu0 0.0
    %877 = vmatpush1.msra.mxu0 0.0
    %878 = vmatprep.subr.mxu0 0.0
    %879 = vmatpush1.msra.mxu0 0.0
    %880 = vmatprep.subr.mxu0 0.0
    %881 = vmatpush1.msra.mxu0 0.0
    %882 = vmatprep.subr.mxu0 0.0
    %883 = vmatpush1.msra.mxu0 0.0
    %884 = vmatprep.subr.mxu0 0.0
    %885 = vmatpush1.msra.mxu0 0.0
    %886 = vmatprep.subr.mxu0 0.0
    %887 = vmatpush1.msra.mxu0 0.0
    %888 = vmatprep.subr.mxu0 0.0
    %889 = vmatpush1.msra.mxu0 0.0
    %890 = vmatprep.subr.mxu0 0.0
    %891 = vmatpush1.msra.mxu0 0.0
    %892 = vmatprep.subr.mxu0 0.0
    %893 = vmatpush1.msra.mxu0 0.0
    %894 = vmatprep.subr.mxu0 0.0
    %895 = vmatpush1.msra.mxu0 0.0
    %896 = vmatprep.subr.mxu0 0.0
    %897 = vmatpush1.msra.mxu0 0.0
    %898 = vmatprep.subr.mxu0 0.0
    %899 = vmatpush1.msra.mxu0 0.0
    %900 = vmatprep.subr.mxu0 0.0
    %901 = vmatpush1.msra.mxu0 0.0
    %902 = vmatprep.subr.mxu0 0.0
    %903 = vmatpush1.msra.mxu0 0.0
    %904 = vmatprep.subr.mxu0 0.0
    %905 = vmatpush1.msra.mxu0 0.0
    %906 = vmatprep.subr.mxu0 0.0
    %907 = vmatpush1.msra.mxu0 0.0
    %908 = vmatprep.subr.mxu0 0.0
    %909 = vmatpush1.msra.mxu0 0.0
    %910 = vmatprep.subr.mxu0 0.0
    %911 = vmatpush1.msra.mxu0 0.0
    %912 = vmatprep.subr.mxu0 0.0
    %913 = vmatpush1.msra.mxu0 0.0
    %914 = vmatprep.subr.mxu0 0.0
    %915 = vmatpush1.msra.mxu0 0.0
    %916 = vmatprep.subr.mxu0 0.0
    %917 = vmatpush1.msra.mxu0 0.0
    %918 = vmatprep.mubr.f32.mxu0 0.0
    %919 = vmatmul.mubr.f32.gmra.mrb[0].mxu0 %v837
    %v920 = vpop.f32.mrb[0].mxu0
    %v921 = vadd.f32 %v813, %v920
    %v922 = vpop.f32.mrb[0].mxu0
    %923 = vmatprep.mubr.f32.mxu0 0.0
    %924 = vmatmul.mubr.f32.gmra.mrb[0].mxu0 %v840
    %v925 = vpop.f32.mrb[0].mxu0
    %v926 = vadd.f32 %v818, %v925
    %v927 = vpop.f32.mrb[0].mxu0
    %928 = vmatprep.mubr.f32.mxu0 0.0
    %929 = vmatmul.mubr.f32.gmra.mrb[0].mxu0 %v843
    %v930 = vpop.f32.mrb[0].mxu0
    %v931 = vadd.f32 %v823, %v930
    %v932 = vpop.f32.mrb[0].mxu0
    %933 = vmatprep.mubr.f32.mxu0 0.0
    %934 = vmatmul.mubr.f32.gmra.mrb[0].mxu0 %v846
    %v935 = vpop.f32.mrb[0].mxu0
    %v936 = vadd.f32 %v828, %v935
    %v937 = vpop.f32.mrb[0].mxu0
    %938 = vmatprep.mubr.f32.mxu0 0.0
    %939 = vmatmul.mubr.f32.gmra.mrb[0].mxu0 %v849
    %v940 = vpop.f32.mrb[0].mxu0
    %v941 = vadd.f32 %v833, %v940
    %v942 = vpop.f32.mrb[0].mxu0
    %943 = vdwg.mxu0
    %v944 = vld [vmem:[#allocation10] sm:$0x1]
    %v946 = vlaneseq
    %v947 = vshrl.u32 %v946, 7
    %v948 = vsub.s32 0, %v947
    %v949 = vrot.slane %v944, %v948
    %v951 = vadd.f32 %v921, %v949
    %v952 = vadd.f32 %v926, %v949
    %v953 = vadd.f32 %v931, %v949
    %v954 = vadd.f32 %v936, %v949
    %v955 = vadd.f32 %v941, %v949
    %v956 = vmax.f32 %v951, 0.0
    %v957 = vmax.f32 %v952, 0.0
    %v958 = vmax.f32 %v953, 0.0
    %v959 = vmax.f32 %v954, 0.0
    %v960 = vmax.f32 %v955, 0.0
    %v961 = vld [vmem:[%s13] sm:$0xff]
    %v962 = vld [vmem:[%s13 + $0x8] sm:$0xff]
    %v963 = vld [vmem:[%s13 + $0x10] sm:$0xff]
    %v964 = vld [vmem:[%s13 + $0x18] sm:$0xff]
    %v965 = vld [vmem:[%s13 + $0x20] sm:$0xff]
    %v966 = vld [vmem:[%s13 + $0x28] sm:$0xff]
    %v967 = vld [vmem:[%s13 + $0x30] sm:$0xff]
    %v968 = vld [vmem:[%s13 + $0x38] sm:$0xff]
    %v969 = vld [vmem:[%s13 + $0x40] sm:$0xff]
    %v970 = vld [vmem:[%s13 + $0x48] sm:$0xff]
    %v971 = vld [vmem:[%s13 + $0x50] sm:$0xff]
    %v972 = vld [vmem:[%s13 + $0x58] sm:$0xff]
    %v973 = vld [vmem:[%s13 + $0x60] sm:$0xff]
    %v974 = vld [vmem:[%s13 + $0x68] sm:$0xff]
    %v975 = vld [vmem:[%s13 + $0x70] sm:$0xff]
    %v976 = vld [vmem:[%s13 + $0x78] sm:$0xff]
    %v977 = vld [vmem:[%s13 + $0x80] sm:$0xff]
    %v978 = vld [vmem:[%s13 + $0x88] sm:$0xff]
    %v979 = vld [vmem:[%s13 + $0x90] sm:$0xff]
    %v980 = vld [vmem:[%s13 + $0x98] sm:$0xff]
    %v981 = vld [vmem:[%s13 + $0xa0] sm:$0xff]
    %v982 = vld [vmem:[%s13 + $0xa8] sm:$0xff]
    %v983 = vld [vmem:[%s13 + $0xb0] sm:$0xff]
    %v984 = vld [vmem:[%s13 + $0xb8] sm:$0xff]
    %v985 = vld [vmem:[%s13 + $0xc0] sm:$0xff]
    %v986 = vld [vmem:[%s13 + $0xc8] sm:$0xff]
    %v987 = vld [vmem:[%s13 + $0xd0] sm:$0xff]
    %v988 = vld [vmem:[%s13 + $0xd8] sm:$0xff]
    %v989 = vld [vmem:[%s13 + $0xe0] sm:$0xff]
    %v990 = vld [vmem:[%s13 + $0xe8] sm:$0xff]
    %v991 = vld [vmem:[%s13 + $0xf0] sm:$0xff]
    %v992 = vld [vmem:[%s13 + $0xf8] sm:$0xff]
    %v993 = vld [vmem:[%s14] sm:$0x3]
    %v995 = vlaneseq
    %v996 = vshrl.u32 %v995, 7
    %v997 = vsub.s32 0, %v996
    %v998 = vrot.slane %v993, %v997
    %v999 = vlaneseq
    %v1000 = vshrl.u32 %v999, 7
    %v1001 = vsub.s32 1, %v1000
    %v1002 = vrot.slane %v993, %v1001
    %1005 = vmatprep.subr.mxu0 %v962
    %1006 = vmatpush1.msra.mxu0 %v961
    %1007 = vmatprep.subr.mxu0 %v964
    %1008 = vmatpush1.msra.mxu0 %v963
    %1009 = vmatprep.subr.mxu0 %v966
    %1010 = vmatpush1.msra.mxu0 %v965
    %1011 = vmatprep.subr.mxu0 %v968
    %1012 = vmatpush1.msra.mxu0 %v967
    %1013 = vmatprep.subr.mxu0 %v970
    %1014 = vmatpush1.msra.mxu0 %v969
    %1015 = vmatprep.subr.mxu0 %v972
    %1016 = vmatpush1.msra.mxu0 %v971
    %1017 = vmatprep.subr.mxu0 %v974
    %1018 = vmatpush1.msra.mxu0 %v973
    %1019 = vmatprep.subr.mxu0 %v976
    %1020 = vmatpush1.msra.mxu0 %v975
    %1021 = vmatprep.subr.mxu0 %v978
    %1022 = vmatpush1.msra.mxu0 %v977
    %1023 = vmatprep.subr.mxu0 %v980
    %1024 = vmatpush1.msra.mxu0 %v979
    %1025 = vmatprep.subr.mxu0 %v982
    %1026 = vmatpush1.msra.mxu0 %v981
    %1027 = vmatprep.subr.mxu0 %v984
    %1028 = vmatpush1.msra.mxu0 %v983
    %1029 = vmatprep.subr.mxu0 %v986
    %1030 = vmatpush1.msra.mxu0 %v985
    %1031 = vmatprep.subr.mxu0 %v988
    %1032 = vmatpush1.msra.mxu0 %v987
    %1033 = vmatprep.subr.mxu0 %v990
    %1034 = vmatpush1.msra.mxu0 %v989
    %1035 = vmatprep.subr.mxu0 %v992
    %1036 = vmatpush1.msra.mxu0 %v991
    %1037 = vmatprep.subr.mxu0 0.0
    %1038 = vmatpush1.msra.mxu0 0.0
    %1039 = vmatprep.subr.mxu0 0.0
    %1040 = vmatpush1.msra.mxu0 0.0
    %1041 = vmatprep.subr.mxu0 0.0
    %1042 = vmatpush1.msra.mxu0 0.0
    %1043 = vmatprep.subr.mxu0 0.0
    %1044 = vmatpush1.msra.mxu0 0.0
    %1045 = vmatprep.subr.mxu0 0.0
    %1046 = vmatpush1.msra.mxu0 0.0
    %1047 = vmatprep.subr.mxu0 0.0
    %1048 = vmatpush1.msra.mxu0 0.0
    %1049 = vmatprep.subr.mxu0 0.0
    %1050 = vmatpush1.msra.mxu0 0.0
    %1051 = vmatprep.subr.mxu0 0.0
    %1052 = vmatpush1.msra.mxu0 0.0
    %1053 = vmatprep.subr.mxu0 0.0
    %1054 = vmatpush1.msra.mxu0 0.0
    %1055 = vmatprep.subr.mxu0 0.0
    %1056 = vmatpush1.msra.mxu0 0.0
    %1057 = vmatprep.subr.mxu0 0.0
    %1058 = vmatpush1.msra.mxu0 0.0
    %1059 = vmatprep.subr.mxu0 0.0
    %1060 = vmatpush1.msra.mxu0 0.0
    %1061 = vmatprep.subr.mxu0 0.0
    %1062 = vmatpush1.msra.mxu0 0.0
    %1063 = vmatprep.subr.mxu0 0.0
    %1064 = vmatpush1.msra.mxu0 0.0
    %1065 = vmatprep.subr.mxu0 0.0
    %1066 = vmatpush1.msra.mxu0 0.0
    %1067 = vmatprep.subr.mxu0 0.0
    %1068 = vmatpush1.msra.mxu0 0.0
    %1069 = vmatprep.mubr.f32.mxu0 0.0
    %1070 = vmatmul.mubr.f32.gmra.mrb[0].mxu0 %v956
    %v1071 = vpop.f32.mrb[0].mxu0
    %v1072 = vadd.f32 %v998, %v1071
    %v1073 = vpop.f32.mrb[0].mxu0
    %v1074 = vadd.f32 %v1002, %v1073
    %1075 = vmatprep.mubr.f32.mxu0 0.0
    %1076 = vmatmul.mubr.f32.gmra.mrb[0].mxu0 %v957
    %v1077 = vpop.f32.mrb[0].mxu0
    %v1078 = vadd.f32 %v998, %v1077
    %v1079 = vpop.f32.mrb[0].mxu0
    %v1080 = vadd.f32 %v1002, %v1079
    %1081 = vmatprep.mubr.f32.mxu0 0.0
    %1082 = vmatmul.mubr.f32.gmra.mrb[0].mxu0 %v958
    %v1083 = vpop.f32.mrb[0].mxu0
    %v1084 = vadd.f32 %v998, %v1083
    %v1085 = vpop.f32.mrb[0].mxu0
    %v1086 = vadd.f32 %v1002, %v1085
    %1087 = vmatprep.mubr.f32.mxu0 0.0
    %1088 = vmatmul.mubr.f32.gmra.mrb[0].mxu0 %v959
    %v1089 = vpop.f32.mrb[0].mxu0
    %v1090 = vadd.f32 %v998, %v1089
    %v1091 = vpop.f32.mrb[0].mxu0
    %v1092 = vadd.f32 %v1002, %v1091
    %1093 = vmatprep.mubr.f32.mxu0 0.0
    %1094 = vmatmul.mubr.f32.gmra.mrb[0].mxu0 %v960
    %v1095 = vpop.f32.mrb[0].mxu0
    %v1096 = vadd.f32 %v998, %v1095
    %v1097 = vpop.f32.mrb[0].mxu0
    %v1098 = vadd.f32 %v1002, %v1097
    %1099 = vdwg.mxu0
    %v1100 = vld [vmem:[%s12] sm:$0xff]
    %v1101 = vld [vmem:[%s12 + $0x8] sm:$0xff]
    %v1102 = vld [vmem:[%s12 + $0x10] sm:$0xff]
    %v1103 = vld [vmem:[%s12 + $0x18] sm:$0xff]
    %v1104 = vld [vmem:[%s12 + $0x20] sm:$0x3]
    %v1105 = vld [vmem:[#allocation11] sm:$0xff]
    %v1106 = vld [vmem:[#allocation11 + $0x8] sm:$0xff]
    %v1107 = vld [vmem:[#allocation11 + $0x10] sm:$0xff]
    %v1108 = vld [vmem:[#allocation11 + $0x18] sm:$0xff]
    %v1109 = vld [vmem:[#allocation11 + $0x20] sm:$0xff]
    %v1110 = vld [vmem:[#allocation11 + $0x28] sm:$0xff]
    %v1111 = vld [vmem:[#allocation11 + $0x30] sm:$0xff]
    %v1112 = vld [vmem:[#allocation11 + $0x38] sm:$0xff]
    %v1113 = vld [vmem:[#allocation11 + $0x40] sm:$0xff]
    %v1114 = vld [vmem:[#allocation11 + $0x48] sm:$0xff]
    %v1115 = vld [vmem:[#allocation11 + $0x50] sm:$0xff]
    %v1116 = vld [vmem:[#allocation11 + $0x58] sm:$0xff]
    %v1117 = vld [vmem:[#allocation11 + $0x60] sm:$0xff]
    %v1118 = vld [vmem:[#allocation11 + $0x68] sm:$0xff]
    %v1119 = vld [vmem:[#allocation11 + $0x70] sm:$0xff]
    %v1120 = vld [vmem:[#allocation11 + $0x78] sm:$0xff]
    %v1121 = vld [vmem:[#allocation11 + $0x80] sm:$0xff]
    %v1122 = vld [vmem:[#allocation11 + $0x88] sm:$0xff]
    %v1123 = vld [vmem:[#allocation11 + $0x90] sm:$0xff]
    %v1124 = vld [vmem:[#allocation11 + $0x98] sm:$0xff]
    %v1125 = vld [vmem:[#allocation11 + $0xa0] sm:$0xff]
    %v1126 = vld [vmem:[#allocation11 + $0xa8] sm:$0xff]
    %v1127 = vld [vmem:[#allocation11 + $0xb0] sm:$0xff]
    %v1128 = vld [vmem:[#allocation11 + $0xb8] sm:$0xff]
    %v1129 = vld [vmem:[#allocation11 + $0xc0] sm:$0xff]
    %v1130 = vld [vmem:[#allocation11 + $0xc8] sm:$0xff]
    %v1131 = vld [vmem:[#allocation11 + $0xd0] sm:$0xff]
    %v1132 = vld [vmem:[#allocation11 + $0xd8] sm:$0xff]
    %v1133 = vld [vmem:[#allocation11 + $0xe0] sm:$0xff]
    %v1134 = vld [vmem:[#allocation11 + $0xe8] sm:$0xff]
    %v1135 = vld [vmem:[#allocation11 + $0xf0] sm:$0xff]
    %v1136 = vld [vmem:[#allocation11 + $0xf8] sm:$0xff]
    %1137 = vmatprep.subr.mxu0 %v1106
    %1138 = vmatpush1.msra.mxu0 %v1105
    %1139 = vmatprep.subr.mxu0 %v1108
    %1140 = vmatpush1.msra.mxu0 %v1107
    %1141 = vmatprep.subr.mxu0 %v1110
    %1142 = vmatpush1.msra.mxu0 %v1109
    %1143 = vmatprep.subr.mxu0 %v1112
    %1144 = vmatpush1.msra.mxu0 %v1111
    %1145 = vmatprep.subr.mxu0 %v1114
    %1146 = vmatpush1.msra.mxu0 %v1113
    %1147 = vmatprep.subr.mxu0 %v1116
    %1148 = vmatpush1.msra.mxu0 %v1115
    %1149 = vmatprep.subr.mxu0 %v1118
    %1150 = vmatpush1.msra.mxu0 %v1117
    %1151 = vmatprep.subr.mxu0 %v1120
    %1152 = vmatpush1.msra.mxu0 %v1119
    %1153 = vmatprep.subr.mxu0 %v1122
    %1154 = vmatpush1.msra.mxu0 %v1121
    %1155 = vmatprep.subr.mxu0 %v1124
    %1156 = vmatpush1.msra.mxu0 %v1123
    %1157 = vmatprep.subr.mxu0 %v1126
    %1158 = vmatpush1.msra.mxu0 %v1125
    %1159 = vmatprep.subr.mxu0 %v1128
    %1160 = vmatpush1.msra.mxu0 %v1127
    %1161 = vmatprep.subr.mxu0 %v1130
    %1162 = vmatpush1.msra.mxu0 %v1129
    %1163 = vmatprep.subr.mxu0 %v1132
    %1164 = vmatpush1.msra.mxu0 %v1131
    %1165 = vmatprep.subr.mxu0 %v1134
    %1166 = vmatpush1.msra.mxu0 %v1133
    %1167 = vmatprep.subr.mxu0 %v1136
    %1168 = vmatpush1.msra.mxu0 %v1135
    %1169 = vmatprep.subr.mxu0 0.0
    %1170 = vmatpush1.msra.mxu0 0.0
    %1171 = vmatprep.subr.mxu0 0.0
    %1172 = vmatpush1.msra.mxu0 0.0
    %1173 = vmatprep.subr.mxu0 0.0
    %1174 = vmatpush1.msra.mxu0 0.0
    %1175 = vmatprep.subr.mxu0 0.0
    %1176 = vmatpush1.msra.mxu0 0.0
    %1177 = vmatprep.subr.mxu0 0.0
    %1178 = vmatpush1.msra.mxu0 0.0
    %1179 = vmatprep.subr.mxu0 0.0
    %1180 = vmatpush1.msra.mxu0 0.0
    %1181 = vmatprep.subr.mxu0 0.0
    %1182 = vmatpush1.msra.mxu0 0.0
    %1183 = vmatprep.subr.mxu0 0.0
    %1184 = vmatpush1.msra.mxu0 0.0
    %1185 = vmatprep.subr.mxu0 0.0
    %1186 = vmatpush1.msra.mxu0 0.0
    %1187 = vmatprep.subr.mxu0 0.0
    %1188 = vmatpush1.msra.mxu0 0.0
    %1189 = vmatprep.subr.mxu0 0.0
    %1190 = vmatpush1.msra.mxu0 0.0
    %1191 = vmatprep.subr.mxu0 0.0
    %1192 = vmatpush1.msra.mxu0 0.0
    %1193 = vmatprep.subr.mxu0 0.0
    %1194 = vmatpush1.msra.mxu0 0.0
    %1195 = vmatprep.subr.mxu0 0.0
    %1196 = vmatpush1.msra.mxu0 0.0
    %1197 = vmatprep.subr.mxu0 0.0
    %1198 = vmatpush1.msra.mxu0 0.0
    %1199 = vmatprep.subr.mxu0 0.0
    %1200 = vmatpush1.msra.mxu0 0.0
    %1201 = vmatprep.mubr.f32.mxu0 0.0
    %1202 = vmatmul.mubr.f32.gmra.mrb[0].mxu0 %v956
    %v1203 = vpop.f32.mrb[0].mxu0
    %v1204 = vadd.f32 0.0, %v1203
    %v1205 = vpop.f32.mrb[0].mxu0
    %v1206 = vadd.f32 0.0, %v1205
    %1207 = vmatprep.mubr.f32.mxu0 0.0
    %1208 = vmatmul.mubr.f32.gmra.mrb[0].mxu0 %v957
    %v1209 = vpop.f32.mrb[0].mxu0
    %v1210 = vadd.f32 0.0, %v1209
    %v1211 = vpop.f32.mrb[0].mxu0
    %v1212 = vadd.f32 0.0, %v1211
    %1213 = vmatprep.mubr.f32.mxu0 0.0
    %1214 = vmatmul.mubr.f32.gmra.mrb[0].mxu0 %v958
    %v1215 = vpop.f32.mrb[0].mxu0
    %v1216 = vadd.f32 0.0, %v1215
    %v1217 = vpop.f32.mrb[0].mxu0
    %v1218 = vadd.f32 0.0, %v1217
    %1219 = vmatprep.mubr.f32.mxu0 0.0
    %1220 = vmatmul.mubr.f32.gmra.mrb[0].mxu0 %v959
    %v1221 = vpop.f32.mrb[0].mxu0
    %v1222 = vadd.f32 0.0, %v1221
    %v1223 = vpop.f32.mrb[0].mxu0
    %v1224 = vadd.f32 0.0, %v1223
    %1225 = vmatprep.mubr.f32.mxu0 0.0
    %1226 = vmatmul.mubr.f32.gmra.mrb[0].mxu0 %v960
    %v1227 = vpop.f32.mrb[0].mxu0
    %v1228 = vadd.f32 0.0, %v1227
    %v1229 = vpop.f32.mrb[0].mxu0
    %v1230 = vadd.f32 0.0, %v1229
    %1231 = vdwg.mxu0
    %v1233 = vsel %vm259, %v1100, 0
    %v1236 = vsel %vm259, %v1101, 0
    %v1239 = vsel %vm259, %v1102, 0
    %v1242 = vsel %vm259, %v1103, 0
    %v1245 = vsel %vm259, %v1104, 0
    %v1248 = vsel %vm275, %v1096, 0
    %v1251 = vsel %vm275, %v1098, 0
    %1253 = vmatprep.subr.mxu0 %v1074
    %1254 = vmatpush1.msra.mxu0 %v1072
    %1255 = vmatprep.subr.mxu0 %v1080
    %1256 = vmatpush1.msra.mxu0 %v1078
    %1257 = vmatprep.subr.mxu0 %v1086
    %1258 = vmatpush1.msra.mxu0 %v1084
    %1259 = vmatprep.subr.mxu0 %v1092
    %1260 = vmatpush1.msra.mxu0 %v1090
    %1261 = vmatprep.subr.mxu0 %v1251
    %1262 = vmatpush1.msra.mxu0 %v1248
    %1263 = vmatprep.subr.mxu0 0.0
    %1264 = vmatpush1.msra.mxu0 0.0
    %1265 = vmatprep.subr.mxu0 0.0
    %1266 = vmatpush1.msra.mxu0 0.0
    %1267 = vmatprep.subr.mxu0 0.0
    %1268 = vmatpush1.msra.mxu0 0.0
    %1269 = vmatprep.subr.mxu0 0.0
    %1270 = vmatpush1.msra.mxu0 0.0
    %1271 = vmatprep.subr.mxu0 0.0
    %1272 = vmatpush1.msra.mxu0 0.0
    %1273 = vmatprep.subr.mxu0 0.0
    %1274 = vmatpush1.msra.mxu0 0.0
    %1275 = vmatprep.subr.mxu0 0.0
    %1276 = vmatpush1.msra.mxu0 0.0
    %1277 = vmatprep.subr.mxu0 0.0
    %1278 = vmatpush1.msra.mxu0 0.0
    %1279 = vmatprep.subr.mxu0 0.0
    %1280 = vmatpush1.msra.mxu0 0.0
    %1281 = vmatprep.subr.mxu0 0.0
    %1282 = vmatpush1.msra.mxu0 0.0
    %1283 = vmatprep.subr.mxu0 0.0
    %1284 = vmatpush1.msra.mxu0 0.0
    %1285 = vmatprep.subr.mxu0 0.0
    %1286 = vmatpush1.msra.mxu0 0.0
    %1287 = vmatprep.subr.mxu0 0.0
    %1288 = vmatpush1.msra.mxu0 0.0
    %1289 = vmatprep.subr.mxu0 0.0
    %1290 = vmatpush1.msra.mxu0 0.0
    %1291 = vmatprep.subr.mxu0 0.0
    %1292 = vmatpush1.msra.mxu0 0.0
    %1293 = vmatprep.subr.mxu0 0.0
    %1294 = vmatpush1.msra.mxu0 0.0
    %1295 = vmatprep.subr.mxu0 0.0
    %1296 = vmatpush1.msra.mxu0 0.0
    %1297 = vmatprep.subr.mxu0 0.0
    %1298 = vmatpush1.msra.mxu0 0.0
    %1299 = vmatprep.subr.mxu0 0.0
    %1300 = vmatpush1.msra.mxu0 0.0
    %1301 = vmatprep.subr.mxu0 0.0
    %1302 = vmatpush1.msra.mxu0 0.0
    %1303 = vmatprep.subr.mxu0 0.0
    %1304 = vmatpush1.msra.mxu0 0.0
    %1305 = vmatprep.subr.mxu0 0.0
    %1306 = vmatpush1.msra.mxu0 0.0
    %1307 = vmatprep.subr.mxu0 0.0
    %1308 = vmatpush1.msra.mxu0 0.0
    %1309 = vmatprep.subr.mxu0 0.0
    %1310 = vmatpush1.msra.mxu0 0.0
    %1311 = vmatprep.subr.mxu0 0.0
    %1312 = vmatpush1.msra.mxu0 0.0
    %1313 = vmatprep.subr.mxu0 0.0
    %1314 = vmatpush1.msra.mxu0 0.0
    %1315 = vmatprep.subr.mxu0 0.0
    %1316 = vmatpush1.msra.mxu0 0.0
    %1317 = vmatprep.mubr.f32.mxu0 0.0
    %1318 = vmatmul.mubr.f32.gmra.mrb[0].mxu0 %v1233
    %v1319 = vpop.f32.mrb[0].mxu0
    %v1320 = vadd.f32 %v1204, %v1319
    %v1321 = vpop.f32.mrb[0].mxu0
    %v1322 = vadd.f32 %v1206, %v1321
    %1323 = vmatprep.mubr.f32.mxu0 0.0
    %1324 = vmatmul.mubr.f32.gmra.mrb[0].mxu0 %v1236
    %v1325 = vpop.f32.mrb[0].mxu0
    %v1326 = vadd.f32 %v1210, %v1325
    %v1327 = vpop.f32.mrb[0].mxu0
    %v1328 = vadd.f32 %v1212, %v1327
    %1329 = vmatprep.mubr.f32.mxu0 0.0
    %1330 = vmatmul.mubr.f32.gmra.mrb[0].mxu0 %v1239
    %v1331 = vpop.f32.mrb[0].mxu0
    %v1332 = vadd.f32 %v1216, %v1331
    %v1333 = vpop.f32.mrb[0].mxu0
    %v1334 = vadd.f32 %v1218, %v1333
    %1335 = vmatprep.mubr.f32.mxu0 0.0
    %1336 = vmatmul.mubr.f32.gmra.mrb[0].mxu0 %v1242
    %v1337 = vpop.f32.mrb[0].mxu0
    %v1338 = vadd.f32 %v1222, %v1337
    %v1339 = vpop.f32.mrb[0].mxu0
    %v1340 = vadd.f32 %v1224, %v1339
    %1341 = vmatprep.mubr.f32.mxu0 0.0
    %1342 = vmatmul.mubr.f32.gmra.mrb[0].mxu0 %v1245
    %v1343 = vpop.f32.mrb[0].mxu0
    %v1344 = vadd.f32 %v1228, %v1343
    %v1345 = vpop.f32.mrb[0].mxu0
    %v1346 = vadd.f32 %v1230, %v1345
    %1347 = vdwg.mxu0
    %v1348 = vld [vmem:[%s16] sm:$0x3]
    %v1350 = vlaneseq
    %v1351 = vshrl.u32 %v1350, 7
    %v1352 = vsub.s32 0, %v1351
    %v1353 = vrot.slane %v1348, %v1352
    %v1354 = vlaneseq
    %v1355 = vshrl.u32 %v1354, 7
    %v1356 = vsub.s32 1, %v1355
    %v1357 = vrot.slane %v1348, %v1356
    %v1360 = vadd.f32 %v1320, %v1353
    %v1361 = vadd.f32 %v1322, %v1357
    %v1362 = vadd.f32 %v1326, %v1353
    %v1363 = vadd.f32 %v1328, %v1357
    %v1364 = vadd.f32 %v1332, %v1353
    %v1365 = vadd.f32 %v1334, %v1357
    %v1366 = vadd.f32 %v1338, %v1353
    %v1367 = vadd.f32 %v1340, %v1357
    %v1368 = vadd.f32 %v1344, %v1353
    %v1369 = vadd.f32 %v1346, %v1357
    %v1370 = vmax.f32 %v1360, 0.0
    %v1371 = vmax.f32 %v1361, 0.0
    %v1372 = vmax.f32 %v1362, 0.0
    %v1373 = vmax.f32 %v1363, 0.0
    %v1374 = vmax.f32 %v1364, 0.0
    %v1375 = vmax.f32 %v1365, 0.0
    %v1376 = vmax.f32 %v1366, 0.0
    %v1377 = vmax.f32 %v1367, 0.0
    %v1378 = vmax.f32 %v1368, 0.0
    %v1379 = vmax.f32 %v1369, 0.0
    %1380 = vst [vmem:[#allocation13] sm:$0xff] %v1370
    %1381 = vst [vmem:[#allocation13 + $0x8] sm:$0xff] %v1371
    %1382 = vst [vmem:[#allocation13 + $0x10] sm:$0xff] %v1372
    %1383 = vst [vmem:[#allocation13 + $0x18] sm:$0xff] %v1373
    %1384 = vst [vmem:[#allocation13 + $0x20] sm:$0xff] %v1374
    %1385 = vst [vmem:[#allocation13 + $0x28] sm:$0xff] %v1375
    %1386 = vst [vmem:[#allocation13 + $0x30] sm:$0xff] %v1376
    %1387 = vst [vmem:[#allocation13 + $0x38] sm:$0xff] %v1377
    %1388 = vst [vmem:[#allocation13 + $0x40] sm:$0x3] %v1378
    %1389 = vst [vmem:[#allocation13 + $0x48] sm:$0x3] %v1379
    // Predicated region
    $region94: #{tpu_custom_call.1} parent=1 // pred_check
      _
    $region95: #{tpu_custom_call.1} parent=1 // pred_check_branch
      %1391 = sbr.rel (0) target = $region97
    $region96: #{tpu_custom_call.1} parent=1 // pred_region
      %s1393 = ssub.s32 1280, 1280
      %1394 = vsyncadd [#allocation4], %s1393
      %s1395 = sshll.u32 [#allocation13], 4
      %s1396 = int_to_ptr.vmem [resolvable:$true] %s1395
      %1401 = dma.vmem_to_hbm [thread:$0]  %s1396, 1280, %s17, [#allocation4], 256, 256, 16
    $region97: #{tpu_custom_call.1} parent=1 // pred_fallthru
      _
    // Predicated region
    $region98: #{tpu_custom_call.1} parent=1 // pred_check
      _
    $region99: #{tpu_custom_call.1} parent=1 // pred_check_branch
      %1403 = sbr.rel (0) target = $region101
    $region100: #{tpu_custom_call.1} parent=1 // pred_region
      %1404 = dma.done [#allocation4], 1280
    $region101: #{tpu_custom_call.1} parent=1 // pred_fallthru
      _
    %1405 = vsyncpa [#allocation3], 1
    %1406 = vsyncpa [#allocation6], 1
    %1407 = vsyncpa [#allocation9], 1
    %1408 = vsyncpa [#allocation12], 1
    %1409 = vsyncpa [#allocation4], 1

</llo_original>
